<compile_context>
chip_gen: v7x
topology: tpu7x:2x2x1
jax: 0.10.0
libtpu: 0.0.40
codegen_flags: <defaults>
</compile_context>

<pallas_src>
import functools

import jax
import jax.numpy as jnp
from jax import lax
from jax.experimental import pallas as pl
from jax.experimental.pallas import tpu as pltpu


def _basic_block_kernel(x_ref, w1_ref, b1_ref, w2_ref, b2_ref, mask_ref,
                        o_ref, h_ref, stk_ref, *, wp, margin, l_out):
    """One grid step = one group of images packed along the lane axis.

    x_ref:    (Cp, l_e)      bf16 zero-margined, lane-packed padded images ("E-frame")
    w*_ref:   (Cp, 9*Cp)     bf16 3x3 taps (tap-major columns) with BN scale folded in
    b*_ref:   (Cp, 1)        f32 folded BN bias
    mask_ref: (1, l_out)     1 inside HxW, 0 on the spatial halo / inter-image gap
    o_ref:    (Cp, l_out)    output on the packed padded grids (cropped by the wrapper)
    h_ref:    (Cp, l_e)      bf16 VMEM scratch: intermediate activation on the E-frame
    stk_ref:  (9*Cp, l_out)  bf16 VMEM scratch: tap-stacked (im2col) matmul operand
    """
    cp = o_ref.shape[0]
    shifts = [(ky - 1) * wp + (kx - 1) for ky in range(3) for kx in range(3)]

    # ---- conv1 (+ folded BN1): ONE K=9*Cp MXU matmul against the tap-stacked operand ----
    for t, s in enumerate(shifts):
        stk_ref[t * cp:(t + 1) * cp, :] = x_ref[:, margin + s:margin + s + l_out]
    acc1 = jnp.dot(w1_ref[...], stk_ref[...], preferred_element_type=jnp.float32)
    # f32 epilogue; the mask zeroes the halo / inter-image gap so conv2 sees zero padding.
    h = (jnp.maximum(acc1 + b1_ref[...], 0.0) * mask_ref[...]).astype(h_ref.dtype)

    # Stage h on the margined frame so conv2 can reuse the shifted-slice trick.  Only the
    # two margin strips need clearing (the in-window halo is already zeroed by the mask);
    # kept output pixels never read the margins — this just keeps cropped columns finite.
    h_ref[:, 0:margin] = jnp.zeros((cp, margin), h_ref.dtype)
    h_ref[:, margin + l_out:margin + l_out + margin] = jnp.zeros((cp, margin), h_ref.dtype)
    h_ref[:, margin:margin + l_out] = h

    # ---- conv2 (+ folded BN2) + identity shortcut + ReLU (f32 epilogue) ----
    for t, s in enumerate(shifts):
        stk_ref[t * cp:(t + 1) * cp, :] = h_ref[:, margin + s:margin + s + l_out]
    acc2 = jnp.dot(w2_ref[...], stk_ref[...], preferred_element_type=jnp.float32)
    res = x_ref[:, margin:margin + l_out].astype(jnp.float32)
    o_ref[...] = jnp.maximum(acc2 + b2_ref[...] + res, 0.0).astype(o_ref.dtype)


def basic_block_forward(x, w1, g1, beta1, mu1, var1, w2, g2, beta2, mu2, var2,
                        eps=1e-5, lane_budget=4096):
    """Eval-mode BasicBlock forward (stride=1, identity shortcut). x: NCHW float32."""
    n, c_in, h, w = x.shape
    planes = w1.shape[0]
    assert w1.shape == (planes, c_in, 3, 3) and w2.shape == (planes, planes, 3, 3)
    assert c_in == planes, "only the identity-shortcut configuration is implemented"

    hp, wp = h + 2, w + 2
    npix = hp * wp                                       # padded-grid pixels per image
    m = wp + 1                                           # max |tap shift| along lanes
    l_img = ((npix + 127) // 128) * 128                  # lane-dense per-image frame
    margin = max(128, ((m + 127) // 128) * 128)          # 128-aligned E-frame halo margin
    cp = max(16, ((planes + 15) // 16) * 16)             # channels -> bf16 sublane multiple

    # ---- pack several images per grid step along the lane axis; keep >= 2 grid steps
    #      once the batch is big enough so both v7x TensorCores get work and the input
    #      DMA can pipeline under compute. ----
    g = max(1, min(n, lane_budget // l_img))
    if n >= 4:
        g = max(1, min(g, n // 2))
    n_groups = (n + g - 1) // g
    n_pad = n_groups * g
    l_out = g * l_img                                    # output lanes / step (mult of 128)
    l_e = margin + l_out + margin                        # input E-frame lanes / step

    # ---- fold eval-mode BN into the conv weights (bf16) and a per-channel f32 bias ----
    s1 = g1 / jnp.sqrt(var1 + eps)
    s2 = g2 / jnp.sqrt(var2 + eps)
    b1 = jnp.pad(beta1 - mu1 * s1, (0, cp - planes)).reshape(cp, 1).astype(jnp.float32)
    b2 = jnp.pad(beta2 - mu2 * s2, (0, cp - planes)).reshape(cp, 1).astype(jnp.float32)
    w1f = jnp.pad(w1 * s1[:, None, None, None],
                  ((0, cp - planes), (0, cp - c_in), (0, 0), (0, 0)))
    w2f = jnp.pad(w2 * s2[:, None, None, None],
                  ((0, cp - planes), (0, cp - planes), (0, 0), (0, 0)))
    # (Cout, Cin, 3, 3) -> (Cout, 9*Cp): columns ordered tap-major / channel-minor to
    # match the kernel's tap-stacked operand.
    w1t = jnp.transpose(w1f, (0, 2, 3, 1)).reshape(cp, 9 * cp).astype(jnp.bfloat16)
    w2t = jnp.transpose(w2f, (0, 2, 3, 1)).reshape(cp, 9 * cp).astype(jnp.bfloat16)

    # ---- E-frame input: NCHW kept as-is (channels=sublanes, flattened padded grid on the
    #      lane axis), images of a group concatenated along lanes, cast to bf16. ----
    x_p = jnp.pad(x, ((0, n_pad - n), (0, cp - c_in), (1, 1), (1, 1)))
    x_p = jnp.pad(x_p.reshape(n_pad, cp, npix), ((0, 0), (0, 0), (0, l_img - npix)))
    x_p = jnp.moveaxis(x_p.reshape(n_groups, g, cp, l_img), 1, 2)
    x_e = jnp.pad(x_p.reshape(n_groups, cp, l_out),
                  ((0, 0), (0, 0), (margin, margin))).astype(jnp.bfloat16)

    # interior mask on the packed frame: 1 inside HxW, 0 on the halo and inter-image gap
    ii = jnp.arange(hp)[:, None]
    jj = jnp.arange(wp)[None, :]
    interior = ((ii >= 1) & (ii <= h) & (jj >= 1) & (jj <= w)).astype(jnp.float32)
    frame_mask = jnp.pad(interior.reshape(npix), (0, l_img - npix))
    mask = jnp.tile(frame_mask, g).reshape(1, l_out)

    kernel = functools.partial(_basic_block_kernel, wp=wp, margin=margin, l_out=l_out)

    out_flat = pl.pallas_call(
        kernel,
        out_shape=jax.ShapeDtypeStruct((n_groups, cp, l_out), x.dtype),
        grid_spec=pltpu.PrefetchScalarGridSpec(
            num_scalar_prefetch=0,
            grid=(n_groups,),                            # one step per image group
            in_specs=[
                pl.BlockSpec((None, cp, l_e), lambda b: (b, 0, 0)),
                pl.BlockSpec((cp, 9 * cp), lambda b: (0, 0)),
                pl.BlockSpec((cp, 1), lambda b: (0, 0)),
                pl.BlockSpec((cp, 9 * cp), lambda b: (0, 0)),
                pl.BlockSpec((cp, 1), lambda b: (0, 0)),
                pl.BlockSpec((1, l_out), lambda b: (0, 0)),
            ],
            out_specs=pl.BlockSpec((None, cp, l_out), lambda b: (b, 0, 0)),
            scratch_shapes=[
                pltpu.VMEM((cp, l_e), jnp.bfloat16),        # h staged on the margined frame
                pltpu.VMEM((9 * cp, l_out), jnp.bfloat16),  # tap-stacked matmul operand
            ],
        ),
        compiler_params=pltpu.CompilerParams(
            dimension_semantics=("parallel",)),
        # NOTE: at real ResNet sizes (C=64, 56x56, many images/step) raise
        # vmem_limit_bytes (v7x scoped default is 32 MiB of 64 MiB physical) or shrink
        # lane_budget so the double-buffered blocks + scratches fit.
    )(x_e, w1t, b1, w2t, b2, mask)

    # (n_groups, cp, g*l_img) -> crop gap / halo / channel padding -> NCHW
    out = jnp.moveaxis(out_flat.reshape(n_groups, cp, g, l_img), 2, 1)
    out = out.reshape(n_pad, cp, l_img)[:, :, :npix].reshape(n_pad, cp, hp, wp)
    return out[:n, :planes, 1:h + 1, 1:w + 1]


def _reference(x, w1, g1, beta1, mu1, var1, w2, g2, beta2, mu2, var2, eps=1e-5):
    conv = functools.partial(
        lax.conv_general_dilated, window_strides=(1, 1), padding=((1, 1), (1, 1)),
        dimension_numbers=("NCHW", "OIHW", "NCHW"), precision=lax.Precision.HIGHEST)

    def bn(a, g, b, mu, var):
        s = g / jnp.sqrt(var + eps)
        return a * s[None, :, None, None] + (b - mu * s)[None, :, None, None]

    hmid = jnp.maximum(bn(conv(x, w1), g1, beta1, mu1, var1), 0.0)
    y = bn(conv(hmid, w2), g2, beta2, mu2, var2) + x     # identity shortcut
    return jnp.maximum(y, 0.0)


if __name__ == "__main__":
    key = jax.random.PRNGKey(0)
    ks = jax.random.split(key, 11)

    N, C, H, W = 2, 4, 16, 16        # stride=1, in_planes == planes -> identity shortcut
    planes = C

    x = jax.random.normal(ks[0], (N, C, H, W), dtype=jnp.float32)
    w1 = 0.1 * jax.random.normal(ks[1], (planes, C, 3, 3), dtype=jnp.float32)
    g1 = 1.0 + 0.1 * jax.random.normal(ks[2], (planes,), dtype=jnp.float32)
    beta1 = 0.1 * jax.random.normal(ks[3], (planes,), dtype=jnp.float32)
    mu1 = 0.1 * jax.random.normal(ks[4], (planes,), dtype=jnp.float32)
    var1 = jnp.abs(jax.random.normal(ks[5], (planes,), dtype=jnp.float32)) + 0.5
    w2 = 0.1 * jax.random.normal(ks[6], (planes, planes, 3, 3), dtype=jnp.float32)
    g2 = 1.0 + 0.1 * jax.random.normal(ks[7], (planes,), dtype=jnp.float32)
    beta2 = 0.1 * jax.random.normal(ks[8], (planes,), dtype=jnp.float32)
    mu2 = 0.1 * jax.random.normal(ks[9], (planes,), dtype=jnp.float32)
    var2 = jnp.abs(jax.random.normal(ks[10], (planes,), dtype=jnp.float32)) + 0.5

    out = basic_block_forward(x, w1, g1, beta1, mu1, var1, w2, g2, beta2, mu2, var2)
    out = jax.block_until_ready(out)

    ref = _reference(x, w1, g1, beta1, mu1, var1, w2, g2, beta2, mu2, var2)
    assert out.shape == (N, planes, H, W)
    # bf16 matmul operands (with f32 accumulation + f32 epilogue) -> slightly looser tol.
    assert jnp.allclose(out, ref, atol=3e-2, rtol=3e-2), "mismatch vs reference"
    print("KERNEL_OK")
</pallas_src>

<mosaic_0001>
module attributes {stable_mosaic.version = 11 : i64} {
  func.func @_basic_block_kernel(%arg0: i32, %arg1: memref<1x16x1024xbf16, #tpu.memory_space<vmem>>, %arg2: memref<16x144xbf16, #tpu.memory_space<vmem>>, %arg3: memref<16x1xf32, #tpu.memory_space<vmem>>, %arg4: memref<16x144xbf16, #tpu.memory_space<vmem>>, %arg5: memref<16x1xf32, #tpu.memory_space<vmem>>, %arg6: memref<1x768xf32, #tpu.memory_space<vmem>>, %arg7: memref<1x16x768xf32, #tpu.memory_space<vmem>>, %arg8: memref<16x1024xbf16, #tpu.memory_space<vmem>>, %arg9: memref<144x768xbf16, #tpu.memory_space<vmem>>) attributes {dimension_semantics = [#tpu.dimension_semantics<parallel>], iteration_bounds = array<i64: 1>, scalar_prefetch = 0 : i64, scratch_operands = 2 : i64, tpu.core_type = #tpu.core_type<tc>, window_params = [{transform_indices = @transform_0, window_bounds = array<i64: 1, 16, 1024>}, {pipeline_mode = #tpu.pipeline_mode<synchronous>, transform_indices = @transform_1, window_bounds = array<i64: 16, 144>}, {pipeline_mode = #tpu.pipeline_mode<synchronous>, transform_indices = @transform_2, window_bounds = array<i64: 16, 1>}, {pipeline_mode = #tpu.pipeline_mode<synchronous>, transform_indices = @transform_3, window_bounds = array<i64: 16, 144>}, {pipeline_mode = #tpu.pipeline_mode<synchronous>, transform_indices = @transform_4, window_bounds = array<i64: 16, 1>}, {pipeline_mode = #tpu.pipeline_mode<synchronous>, transform_indices = @transform_5, window_bounds = array<i64: 1, 768>}, {transform_indices = @transform_6, window_bounds = array<i64: 1, 16, 768>}]} {
    %c0 = arith.constant 0 : index
    %c0_0 = arith.constant 0 : index
    %c109 = arith.constant 109 : index
    %0 = vector.load %arg1[%c0, %c0_0, %c109] : memref<1x16x1024xbf16, #tpu.memory_space<vmem>>, vector<1x16x768xbf16>
    %1 = vector.shape_cast %0 : vector<1x16x768xbf16> to vector<16x768xbf16>
    %c0_1 = arith.constant 0 : index
    %c0_2 = arith.constant 0 : index
    %2 = vector.load %arg9[%c0_1, %c0_2] : memref<144x768xbf16, #tpu.memory_space<vmem>>, vector<16x768xbf16>
    tpu.vector_store %arg9[%c0_1, %c0_2], %1 {strides = array<i32>} : memref<144x768xbf16, #tpu.memory_space<vmem>>, vector<16x768xbf16>,
    %c0_3 = arith.constant 0 : index
    %c0_4 = arith.constant 0 : index
    %c110 = arith.constant 110 : index
    %3 = vector.load %arg1[%c0_3, %c0_4, %c110] : memref<1x16x1024xbf16, #tpu.memory_space<vmem>>, vector<1x16x768xbf16>
    %4 = vector.shape_cast %3 : vector<1x16x768xbf16> to vector<16x768xbf16>
    %c16 = arith.constant 16 : index
    %c0_5 = arith.constant 0 : index
    %5 = vector.load %arg9[%c16, %c0_5] : memref<144x768xbf16, #tpu.memory_space<vmem>>, vector<16x768xbf16>
    tpu.vector_store %arg9[%c16, %c0_5], %4 {strides = array<i32>} : memref<144x768xbf16, #tpu.memory_space<vmem>>, vector<16x768xbf16>,
    %c0_6 = arith.constant 0 : index
    %c0_7 = arith.constant 0 : index
    %c111 = arith.constant 111 : index
    %6 = vector.load %arg1[%c0_6, %c0_7, %c111] : memref<1x16x1024xbf16, #tpu.memory_space<vmem>>, vector<1x16x768xbf16>
    %7 = vector.shape_cast %6 : vector<1x16x768xbf16> to vector<16x768xbf16>
    %c32 = arith.constant 32 : index
    %c0_8 = arith.constant 0 : index
    %8 = vector.load %arg9[%c32, %c0_8] : memref<144x768xbf16, #tpu.memory_space<vmem>>, vector<16x768xbf16>
    tpu.vector_store %arg9[%c32, %c0_8], %7 {strides = array<i32>} : memref<144x768xbf16, #tpu.memory_space<vmem>>, vector<16x768xbf16>,
    %c0_9 = arith.constant 0 : index
    %c0_10 = arith.constant 0 : index
    %c127 = arith.constant 127 : index
    %9 = vector.load %arg1[%c0_9, %c0_10, %c127] : memref<1x16x1024xbf16, #tpu.memory_space<vmem>>, vector<1x16x768xbf16>
    %10 = vector.shape_cast %9 : vector<1x16x768xbf16> to vector<16x768xbf16>
    %c48 = arith.constant 48 : index
    %c0_11 = arith.constant 0 : index
    %11 = vector.load %arg9[%c48, %c0_11] : memref<144x768xbf16, #tpu.memory_space<vmem>>, vector<16x768xbf16>
    tpu.vector_store %arg9[%c48, %c0_11], %10 {strides = array<i32>} : memref<144x768xbf16, #tpu.memory_space<vmem>>, vector<16x768xbf16>,
    %c0_12 = arith.constant 0 : index
    %c0_13 = arith.constant 0 : index
    %c128 = arith.constant 128 : index
    %12 = vector.load %arg1[%c0_12, %c0_13, %c128] : memref<1x16x1024xbf16, #tpu.memory_space<vmem>>, vector<1x16x768xbf16>
    %13 = vector.shape_cast %12 : vector<1x16x768xbf16> to vector<16x768xbf16>
    %c64 = arith.constant 64 : index
    %c0_14 = arith.constant 0 : index
    %14 = vector.load %arg9[%c64, %c0_14] : memref<144x768xbf16, #tpu.memory_space<vmem>>, vector<16x768xbf16>
    tpu.vector_store %arg9[%c64, %c0_14], %13 {strides = array<i32>} : memref<144x768xbf16, #tpu.memory_space<vmem>>, vector<16x768xbf16>,
    %c0_15 = arith.constant 0 : index
    %c0_16 = arith.constant 0 : index
    %c129 = arith.constant 129 : index
    %15 = vector.load %arg1[%c0_15, %c0_16, %c129] : memref<1x16x1024xbf16, #tpu.memory_space<vmem>>, vector<1x16x768xbf16>
    %16 = vector.shape_cast %15 : vector<1x16x768xbf16> to vector<16x768xbf16>
    %c80 = arith.constant 80 : index
    %c0_17 = arith.constant 0 : index
    %17 = vector.load %arg9[%c80, %c0_17] : memref<144x768xbf16, #tpu.memory_space<vmem>>, vector<16x768xbf16>
    tpu.vector_store %arg9[%c80, %c0_17], %16 {strides = array<i32>} : memref<144x768xbf16, #tpu.memory_space<vmem>>, vector<16x768xbf16>,
    %c0_18 = arith.constant 0 : index
    %c0_19 = arith.constant 0 : index
    %c145 = arith.constant 145 : index
    %18 = vector.load %arg1[%c0_18, %c0_19, %c145] : memref<1x16x1024xbf16, #tpu.memory_space<vmem>>, vector<1x16x768xbf16>
    %19 = vector.shape_cast %18 : vector<1x16x768xbf16> to vector<16x768xbf16>
    %c96 = arith.constant 96 : index
    %c0_20 = arith.constant 0 : index
    %20 = vector.load %arg9[%c96, %c0_20] : memref<144x768xbf16, #tpu.memory_space<vmem>>, vector<16x768xbf16>
    tpu.vector_store %arg9[%c96, %c0_20], %19 {strides = array<i32>} : memref<144x768xbf16, #tpu.memory_space<vmem>>, vector<16x768xbf16>,
    %c0_21 = arith.constant 0 : index
    %c0_22 = arith.constant 0 : index
    %c146 = arith.constant 146 : index
    %21 = vector.load %arg1[%c0_21, %c0_22, %c146] : memref<1x16x1024xbf16, #tpu.memory_space<vmem>>, vector<1x16x768xbf16>
    %22 = vector.shape_cast %21 : vector<1x16x768xbf16> to vector<16x768xbf16>
    %c112 = arith.constant 112 : index
    %c0_23 = arith.constant 0 : index
    %23 = vector.load %arg9[%c112, %c0_23] : memref<144x768xbf16, #tpu.memory_space<vmem>>, vector<16x768xbf16>
    tpu.vector_store %arg9[%c112, %c0_23], %22 {strides = array<i32>} : memref<144x768xbf16, #tpu.memory_space<vmem>>, vector<16x768xbf16>,
    %c0_24 = arith.constant 0 : index
    %c0_25 = arith.constant 0 : index
    %c147 = arith.constant 147 : index
    %24 = vector.load %arg1[%c0_24, %c0_25, %c147] : memref<1x16x1024xbf16, #tpu.memory_space<vmem>>, vector<1x16x768xbf16>
    %25 = vector.shape_cast %24 : vector<1x16x768xbf16> to vector<16x768xbf16>
    %c128_26 = arith.constant 128 : index
    %c0_27 = arith.constant 0 : index
    %26 = vector.load %arg9[%c128_26, %c0_27] : memref<144x768xbf16, #tpu.memory_space<vmem>>, vector<16x768xbf16>
    tpu.vector_store %arg9[%c128_26, %c0_27], %25 {strides = array<i32>} : memref<144x768xbf16, #tpu.memory_space<vmem>>, vector<16x768xbf16>,
    %c0_28 = arith.constant 0 : index
    %c0_29 = arith.constant 0 : index
    %27 = vector.load %arg2[%c0_28, %c0_29] : memref<16x144xbf16, #tpu.memory_space<vmem>>, vector<16x144xbf16>
    %c0_30 = arith.constant 0 : index
    %c0_31 = arith.constant 0 : index
    %28 = vector.load %arg9[%c0_30, %c0_31] : memref<144x768xbf16, #tpu.memory_space<vmem>>, vector<144x768xbf16>
    %cst = arith.constant dense<0.000000e+00> : vector<16x768xf32>
    %29 = tpu.matmul %27, %28, %cst {dimension_numbers = #tpu.dot_dimension_numbers<[1], [0], [0], [1], [0, 0, 1, 1], [], []>} : vector<16x144xbf16>, vector<144x768xbf16>, vector<16x768xf32> -> vector<16x768xf32>
    %c0_32 = arith.constant 0 : index
    %c0_33 = arith.constant 0 : index
    %30 = vector.load %arg3[%c0_32, %c0_33] : memref<16x1xf32, #tpu.memory_space<vmem>>, vector<16x1xf32>
    %31 = vector.broadcast %30 : vector<16x1xf32> to vector<16x768xf32>
    %32 = arith.addf %29, %31 : vector<16x768xf32>
    %cst_34 = arith.constant 0.000000e+00 : f32
    %33 = vector.broadcast %cst_34 : f32 to vector<16x768xf32>
    %34 = arith.maximumf %32, %33 : vector<16x768xf32>
    %c0_35 = arith.constant 0 : index
    %c0_36 = arith.constant 0 : index
    %35 = vector.load %arg6[%c0_35, %c0_36] : memref<1x768xf32, #tpu.memory_space<vmem>>, vector<1x768xf32>
    %36 = vector.broadcast %35 : vector<1x768xf32> to vector<16x768xf32>
    %37 = arith.mulf %34, %36 : vector<16x768xf32>
    %38 = arith.truncf %37 : vector<16x768xf32> to vector<16x768xbf16>
    %cst_37 = arith.constant 0.000000e+00 : bf16
    %39 = vector.broadcast %cst_37 : bf16 to vector<16x128xbf16>
    %c0_38 = arith.constant 0 : index
    %c0_39 = arith.constant 0 : index
    %40 = vector.load %arg8[%c0_38, %c0_39] : memref<16x1024xbf16, #tpu.memory_space<vmem>>, vector<16x128xbf16>
    tpu.vector_store %arg8[%c0_38, %c0_39], %39 {strides = array<i32>} : memref<16x1024xbf16, #tpu.memory_space<vmem>>, vector<16x128xbf16>,
    %cst_40 = arith.constant 0.000000e+00 : bf16
    %41 = vector.broadcast %cst_40 : bf16 to vector<16x128xbf16>
    %c0_41 = arith.constant 0 : index
    %c896 = arith.constant 896 : index
    %42 = vector.load %arg8[%c0_41, %c896] : memref<16x1024xbf16, #tpu.memory_space<vmem>>, vector<16x128xbf16>
    tpu.vector_store %arg8[%c0_41, %c896], %41 {strides = array<i32>} : memref<16x1024xbf16, #tpu.memory_space<vmem>>, vector<16x128xbf16>,
    %c0_42 = arith.constant 0 : index
    %c128_43 = arith.constant 128 : index
    %43 = vector.load %arg8[%c0_42, %c128_43] : memref<16x1024xbf16, #tpu.memory_space<vmem>>, vector<16x768xbf16>
    tpu.vector_store %arg8[%c0_42, %c128_43], %38 {strides = array<i32>} : memref<16x1024xbf16, #tpu.memory_space<vmem>>, vector<16x768xbf16>,
    %c0_44 = arith.constant 0 : index
    %c109_45 = arith.constant 109 : index
    %44 = vector.load %arg8[%c0_44, %c109_45] : memref<16x1024xbf16, #tpu.memory_space<vmem>>, vector<16x768xbf16>
    %c0_46 = arith.constant 0 : index
    %c0_47 = arith.constant 0 : index
    %45 = vector.load %arg9[%c0_46, %c0_47] : memref<144x768xbf16, #tpu.memory_space<vmem>>, vector<16x768xbf16>
    tpu.vector_store %arg9[%c0_46, %c0_47], %44 {strides = array<i32>} : memref<144x768xbf16, #tpu.memory_space<vmem>>, vector<16x768xbf16>,
    %c0_48 = arith.constant 0 : index
    %c110_49 = arith.constant 110 : index
    %46 = vector.load %arg8[%c0_48, %c110_49] : memref<16x1024xbf16, #tpu.memory_space<vmem>>, vector<16x768xbf16>
    %c16_50 = arith.constant 16 : index
    %c0_51 = arith.constant 0 : index
    %47 = vector.load %arg9[%c16_50, %c0_51] : memref<144x768xbf16, #tpu.memory_space<vmem>>, vector<16x768xbf16>
    tpu.vector_store %arg9[%c16_50, %c0_51], %46 {strides = array<i32>} : memref<144x768xbf16, #tpu.memory_space<vmem>>, vector<16x768xbf16>,
    %c0_52 = arith.constant 0 : index
    %c111_53 = arith.constant 111 : index
    %48 = vector.load %arg8[%c0_52, %c111_53] : memref<16x1024xbf16, #tpu.memory_space<vmem>>, vector<16x768xbf16>
    %c32_54 = arith.constant 32 : index
    %c0_55 = arith.constant 0 : index
    %49 = vector.load %arg9[%c32_54, %c0_55] : memref<144x768xbf16, #tpu.memory_space<vmem>>, vector<16x768xbf16>
    tpu.vector_store %arg9[%c32_54, %c0_55], %48 {strides = array<i32>} : memref<144x768xbf16, #tpu.memory_space<vmem>>, vector<16x768xbf16>,
    %c0_56 = arith.constant 0 : index
    %c127_57 = arith.constant 127 : index
    %50 = vector.load %arg8[%c0_56, %c127_57] : memref<16x1024xbf16, #tpu.memory_space<vmem>>, vector<16x768xbf16>
    %c48_58 = arith.constant 48 : index
    %c0_59 = arith.constant 0 : index
    %51 = vector.load %arg9[%c48_58, %c0_59] : memref<144x768xbf16, #tpu.memory_space<vmem>>, vector<16x768xbf16>
    tpu.vector_store %arg9[%c48_58, %c0_59], %50 {strides = array<i32>} : memref<144x768xbf16, #tpu.memory_space<vmem>>, vector<16x768xbf16>,
    %c0_60 = arith.constant 0 : index
    %c128_61 = arith.constant 128 : index
    %52 = vector.load %arg8[%c0_60, %c128_61] : memref<16x1024xbf16, #tpu.memory_space<vmem>>, vector<16x768xbf16>
    %c64_62 = arith.constant 64 : index
    %c0_63 = arith.constant 0 : index
    %53 = vector.load %arg9[%c64_62, %c0_63] : memref<144x768xbf16, #tpu.memory_space<vmem>>, vector<16x768xbf16>
    tpu.vector_store %arg9[%c64_62, %c0_63], %52 {strides = array<i32>} : memref<144x768xbf16, #tpu.memory_space<vmem>>, vector<16x768xbf16>,
    %c0_64 = arith.constant 0 : index
    %c129_65 = arith.constant 129 : index
    %54 = vector.load %arg8[%c0_64, %c129_65] : memref<16x1024xbf16, #tpu.memory_space<vmem>>, vector<16x768xbf16>
    %c80_66 = arith.constant 80 : index
    %c0_67 = arith.constant 0 : index
    %55 = vector.load %arg9[%c80_66, %c0_67] : memref<144x768xbf16, #tpu.memory_space<vmem>>, vector<16x768xbf16>
    tpu.vector_store %arg9[%c80_66, %c0_67], %54 {strides = array<i32>} : memref<144x768xbf16, #tpu.memory_space<vmem>>, vector<16x768xbf16>,
    %c0_68 = arith.constant 0 : index
    %c145_69 = arith.constant 145 : index
    %56 = vector.load %arg8[%c0_68, %c145_69] : memref<16x1024xbf16, #tpu.memory_space<vmem>>, vector<16x768xbf16>
    %c96_70 = arith.constant 96 : index
    %c0_71 = arith.constant 0 : index
    %57 = vector.load %arg9[%c96_70, %c0_71] : memref<144x768xbf16, #tpu.memory_space<vmem>>, vector<16x768xbf16>
    tpu.vector_store %arg9[%c96_70, %c0_71], %56 {strides = array<i32>} : memref<144x768xbf16, #tpu.memory_space<vmem>>, vector<16x768xbf16>,
    %c0_72 = arith.constant 0 : index
    %c146_73 = arith.constant 146 : index
    %58 = vector.load %arg8[%c0_72, %c146_73] : memref<16x1024xbf16, #tpu.memory_space<vmem>>, vector<16x768xbf16>
    %c112_74 = arith.constant 112 : index
    %c0_75 = arith.constant 0 : index
    %59 = vector.load %arg9[%c112_74, %c0_75] : memref<144x768xbf16, #tpu.memory_space<vmem>>, vector<16x768xbf16>
    tpu.vector_store %arg9[%c112_74, %c0_75], %58 {strides = array<i32>} : memref<144x768xbf16, #tpu.memory_space<vmem>>, vector<16x768xbf16>,
    %c0_76 = arith.constant 0 : index
    %c147_77 = arith.constant 147 : index
    %60 = vector.load %arg8[%c0_76, %c147_77] : memref<16x1024xbf16, #tpu.memory_space<vmem>>, vector<16x768xbf16>
    %c128_78 = arith.constant 128 : index
    %c0_79 = arith.constant 0 : index
    %61 = vector.load %arg9[%c128_78, %c0_79] : memref<144x768xbf16, #tpu.memory_space<vmem>>, vector<16x768xbf16>
    tpu.vector_store %arg9[%c128_78, %c0_79], %60 {strides = array<i32>} : memref<144x768xbf16, #tpu.memory_space<vmem>>, vector<16x768xbf16>,
    %c0_80 = arith.constant 0 : index
    %c0_81 = arith.constant 0 : index
    %62 = vector.load %arg4[%c0_80, %c0_81] : memref<16x144xbf16, #tpu.memory_space<vmem>>, vector<16x144xbf16>
    %c0_82 = arith.constant 0 : index
    %c0_83 = arith.constant 0 : index
    %63 = vector.load %arg9[%c0_82, %c0_83] : memref<144x768xbf16, #tpu.memory_space<vmem>>, vector<144x768xbf16>
    %cst_84 = arith.constant dense<0.000000e+00> : vector<16x768xf32>
    %64 = tpu.matmul %62, %63, %cst_84 {dimension_numbers = #tpu.dot_dimension_numbers<[1], [0], [0], [1], [0, 0, 1, 1], [], []>} : vector<16x144xbf16>, vector<144x768xbf16>, vector<16x768xf32> -> vector<16x768xf32>
    %c0_85 = arith.constant 0 : index
    %c0_86 = arith.constant 0 : index
    %c128_87 = arith.constant 128 : index
    %65 = vector.load %arg1[%c0_85, %c0_86, %c128_87] : memref<1x16x1024xbf16, #tpu.memory_space<vmem>>, vector<1x16x768xbf16>
    %66 = vector.shape_cast %65 : vector<1x16x768xbf16> to vector<16x768xbf16>
    %67 = arith.extf %66 : vector<16x768xbf16> to vector<16x768xf32>
    %c0_88 = arith.constant 0 : index
    %c0_89 = arith.constant 0 : index
    %68 = vector.load %arg5[%c0_88, %c0_89] : memref<16x1xf32, #tpu.memory_space<vmem>>, vector<16x1xf32>
    %69 = vector.broadcast %68 : vector<16x1xf32> to vector<16x768xf32>
    %70 = arith.addf %64, %69 : vector<16x768xf32>
    %71 = arith.addf %70, %67 : vector<16x768xf32>
    %cst_90 = arith.constant 0.000000e+00 : f32
    %72 = vector.broadcast %cst_90 : f32 to vector<16x768xf32>
    %73 = arith.maximumf %71, %72 : vector<16x768xf32>
    %c0_91 = arith.constant 0 : index
    %c0_92 = arith.constant 0 : index
    %c0_93 = arith.constant 0 : index
    %74 = vector.load %arg7[%c0_91, %c0_92, %c0_93] : memref<1x16x768xf32, #tpu.memory_space<vmem>>, vector<1x16x768xf32>
    %75 = vector.shape_cast %74 : vector<1x16x768xf32> to vector<16x768xf32>
    %76 = vector.shape_cast %73 : vector<16x768xf32> to vector<1x16x768xf32>
    tpu.vector_store %arg7[%c0_91, %c0_92, %c0_93], %76 {strides = array<i32>} : memref<1x16x768xf32, #tpu.memory_space<vmem>>, vector<1x16x768xf32>,
    return
  }
  func.func @transform_0(%arg0: i32) -> (i32, i32, i32) {
    %c0_i32 = arith.constant 0 : i32
    %c0_i32_0 = arith.constant 0 : i32
    %c0_i32_1 = arith.constant 0 : i32
    return %arg0, %c0_i32, %c0_i32_0 : i32, i32, i32
  }
  func.func @transform_1(%arg0: i32) -> (i32, i32) {
    %c0_i32 = arith.constant 0 : i32
    %c0_i32_0 = arith.constant 0 : i32
    %c0_i32_1 = arith.constant 0 : i32
    return %c0_i32, %c0_i32_0 : i32, i32
  }
  func.func @transform_2(%arg0: i32) -> (i32, i32) {
    %c0_i32 = arith.constant 0 : i32
    %c0_i32_0 = arith.constant 0 : i32
    %c0_i32_1 = arith.constant 0 : i32
    return %c0_i32, %c0_i32_0 : i32, i32
  }
  func.func @transform_3(%arg0: i32) -> (i32, i32) {
    %c0_i32 = arith.constant 0 : i32
    %c0_i32_0 = arith.constant 0 : i32
    %c0_i32_1 = arith.constant 0 : i32
    return %c0_i32, %c0_i32_0 : i32, i32
  }
  func.func @transform_4(%arg0: i32) -> (i32, i32) {
    %c0_i32 = arith.constant 0 : i32
    %c0_i32_0 = arith.constant 0 : i32
    %c0_i32_1 = arith.constant 0 : i32
    return %c0_i32, %c0_i32_0 : i32, i32
  }
  func.func @transform_5(%arg0: i32) -> (i32, i32) {
    %c0_i32 = arith.constant 0 : i32
    %c0_i32_0 = arith.constant 0 : i32
    %c0_i32_1 = arith.constant 0 : i32
    return %c0_i32, %c0_i32_0 : i32, i32
  }
  func.func @transform_6(%arg0: i32) -> (i32, i32, i32) {
    %c0_i32 = arith.constant 0 : i32
    %c0_i32_0 = arith.constant 0 : i32
    %c0_i32_1 = arith.constant 0 : i32
    return %arg0, %c0_i32, %c0_i32_0 : i32, i32, i32
  }
}

</mosaic_0001>

<llo_original>
// kernel: tpu_custom_call.1
$region0: #{tpu_custom_call.1}
  #allocation0 [shape = 'u32[]', space=smem, size = 0x4, offset = 0x4, fixed_abs, tag = 'smem constant byte address 0x4 - core index']
  #allocation1 [shape = 'u32[144,128]{1,0:T(1,128)}', space=vmem, size = 0x12000, scoped, tag = 'internal scratch']
  #allocation2 [shape = 'bf16[16,1024]{1,0:T(16,128)(2,1)}', space=vmem, size = 0x8000, scoped, tag = 'scratch operand']
  #allocation3 [shape = 'bf16[144,768]{1,0:T(16,128)(2,1)}', space=vmem, size = 0x36000, scoped, tag = 'scratch operand']
  %s0 = inlined_call_operand.hbm [shape: bf16[1,16,1024], index: 0, kind: input, shape index: {}]
  %s1 = inlined_call_operand.vmem [shape: bf16[16,144], index: 1, kind: input, shape index: {}]
  %s2 = inlined_call_operand.vmem [shape: f32[16,1], index: 2, kind: input, shape index: {}]
  %s3 = inlined_call_operand.vmem [shape: bf16[16,144], index: 3, kind: input, shape index: {}]
  %s4 = inlined_call_operand.vmem [shape: f32[16,1], index: 4, kind: input, shape index: {}]
  %s5 = inlined_call_operand.vmem [shape: f32[1,768], index: 5, kind: input, shape index: {}]
  %s6 = inlined_call_operand.hbm [shape: f32[1,16,768], index: 6, kind: output, shape index: {}]
  %s7 = sld [smem:[#allocation0]]
  $region38: #{tpu_custom_call.1} parent=0
    _
  %s9 = ssub.s32 1, %s7
  %s10 = scalar_select 0, %s9, %s7
  $region1: #{tpu_custom_call.1} parent=0
    #allocation4 [shape = 'u8[32768]{0}', space=vmem, size = 0x8000, scoped, tag = 'input window, operand 0, single buffered']
    #allocation5 [shape = 's32[1]{0}', space=sflag, size = 0x4, scoped, tag = 'scoped memory for tpu_custom_call.1']
    #allocation6 [shape = 's32[1]{0}', space=sflag, size = 0x4, scoped, tag = 'scoped memory for tpu_custom_call.1']
    #allocation7 [shape = 'u8[49152]{0}', space=vmem, size = 0xc000, scoped, tag = 'output window, operand 0, single buffered']
    %11 = vsyncpa [#allocation5], 0
    %12 = vsyncpa [#allocation6], 0
    // Predicated region
    $region2: #{tpu_custom_call.1} parent=1 // pred_check
      _
    $region3: #{tpu_custom_call.1} parent=1 // pred_check_branch
      %14 = sbr.rel (0) target = $region5
    $region4: #{tpu_custom_call.1} parent=1 // pred_region
      %s16 = ssub.s32 1024, 1024
      %17 = vsyncadd [#allocation5], %s16
      %s18 = sshll.u32 [#allocation4], 4
      %s19 = int_to_ptr.vmem [resolvable:$true] %s18
      %24 = dma.hbm_to_vmem [thread:$0]  %s0, 1024, %s19, [#allocation5], 512, 512, 32
    $region5: #{tpu_custom_call.1} parent=1 // pred_fallthru
      _
    // Predicated region
    $region6: #{tpu_custom_call.1} parent=1 // pred_check
      _
    $region7: #{tpu_custom_call.1} parent=1 // pred_check_branch
      %26 = sbr.rel (0) target = $region9
    $region8: #{tpu_custom_call.1} parent=1 // pred_region
      _
    $region9: #{tpu_custom_call.1} parent=1 // pred_fallthru
      _
    // Predicated region
    $region10: #{tpu_custom_call.1} parent=1 // pred_check
      _
    $region11: #{tpu_custom_call.1} parent=1 // pred_check_branch
      %28 = sbr.rel (0) target = $region13
    $region12: #{tpu_custom_call.1} parent=1 // pred_region
      _
    $region13: #{tpu_custom_call.1} parent=1 // pred_fallthru
      _
    // Predicated region
    $region14: #{tpu_custom_call.1} parent=1 // pred_check
      _
    $region15: #{tpu_custom_call.1} parent=1 // pred_check_branch
      %30 = sbr.rel (0) target = $region17
    $region16: #{tpu_custom_call.1} parent=1 // pred_region
      _
    $region17: #{tpu_custom_call.1} parent=1 // pred_fallthru
      _
    // Predicated region
    $region18: #{tpu_custom_call.1} parent=1 // pred_check
      _
    $region19: #{tpu_custom_call.1} parent=1 // pred_check_branch
      %32 = sbr.rel (0) target = $region21
    $region20: #{tpu_custom_call.1} parent=1 // pred_region
      _
    $region21: #{tpu_custom_call.1} parent=1 // pred_fallthru
      _
    // Predicated region
    $region22: #{tpu_custom_call.1} parent=1 // pred_check
      _
    $region23: #{tpu_custom_call.1} parent=1 // pred_check_branch
      %34 = sbr.rel (0) target = $region25
    $region24: #{tpu_custom_call.1} parent=1 // pred_region
      _
    $region25: #{tpu_custom_call.1} parent=1 // pred_fallthru
      _
    // Predicated region
    $region26: #{tpu_custom_call.1} parent=1 // pred_check
      _
    $region27: #{tpu_custom_call.1} parent=1 // pred_check_branch
      %36 = sbr.rel (0) target = $region29
    $region28: #{tpu_custom_call.1} parent=1 // pred_region
      %37 = dma.done [#allocation5], 1024
    $region29: #{tpu_custom_call.1} parent=1 // pred_fallthru
      _
    %v39 = vld [vmem:[#allocation4] sm:$0xff]
    %v40 = vld [vmem:[#allocation4 + $0x8] sm:$0xff]
    %v41 = vld [vmem:[#allocation4 + $0x10] sm:$0xff]
    %v42 = vld [vmem:[#allocation4 + $0x18] sm:$0xf]
    %v43 = vld [vmem:[#allocation4 + $0x20] sm:$0xff]
    %v44 = vld [vmem:[#allocation4 + $0x28] sm:$0xff]
    %v45 = vld [vmem:[#allocation4 + $0x30] sm:$0xff]
    %v46 = vld [vmem:[#allocation4 + $0x38] sm:$0xf]
    %v55 = vunpack.c.l.b16 %v39
    %v56 = vunpack.c.h.b16 %v39
    %v57 = vunpack.c.l.b16 %v40
    %v58 = vunpack.c.h.b16 %v40
    %v59 = vunpack.c.l.b16 %v41
    %v60 = vunpack.c.h.b16 %v41
    %v61 = vunpack.c.l.b16 %v42
    %v62 = vunpack.c.l.b16 %v43
    %v63 = vunpack.c.h.b16 %v43
    %v64 = vunpack.c.l.b16 %v44
    %v65 = vunpack.c.h.b16 %v44
    %v66 = vunpack.c.l.b16 %v45
    %v67 = vunpack.c.h.b16 %v45
    %v68 = vunpack.c.l.b16 %v46
    %v69 = vpack.c.b16 %v62, %v55
    %v70 = vpack.c.b16 %v63, %v56
    %v71 = vpack.c.b16 %v64, %v57
    %v72 = vpack.c.b16 %v65, %v58
    %v73 = vpack.c.b16 %v66, %v59
    %v74 = vpack.c.b16 %v67, %v60
    %v75 = vpack.c.b16 %v68, %v61
    %76 = vrot.lane.b32.xlu0 %v69, 19
    %v77 = vpop.permute.xlu0 %76
    %78 = vrot.lane.b32.xlu0 %v70, 19
    %v79 = vpop.permute.xlu0 %78
    %80 = vrot.lane.b32.xlu0 %v71, 19
    %v81 = vpop.permute.xlu0 %80
    %82 = vrot.lane.b32.xlu0 %v72, 19
    %v83 = vpop.permute.xlu0 %82
    %84 = vrot.lane.b32.xlu0 %v73, 19
    %v85 = vpop.permute.xlu0 %84
    %86 = vrot.lane.b32.xlu0 %v74, 19
    %v87 = vpop.permute.xlu0 %86
    %88 = vrot.lane.b32.xlu0 %v75, 19
    %v89 = vpop.permute.xlu0 %88
    %vm90 = vcmask 154624
    %v91 = vsel %vm90, %v77, %v79
    %v92 = vsel %vm90, %v79, %v81
    %v93 = vsel %vm90, %v81, %v83
    %v94 = vsel %vm90, %v83, %v85
    %v95 = vsel %vm90, %v85, %v87
    %v96 = vsel %vm90, %v87, %v89
    %103 = vst [vmem:[#allocation3] sm:$0xff] %v91
    %104 = vst [vmem:[#allocation3 + $0x8] sm:$0xff] %v92
    %105 = vst [vmem:[#allocation3 + $0x10] sm:$0xff] %v93
    %106 = vst [vmem:[#allocation3 + $0x18] sm:$0xff] %v94
    %107 = vst [vmem:[#allocation3 + $0x20] sm:$0xff] %v95
    %108 = vst [vmem:[#allocation3 + $0x28] sm:$0xff] %v96
    %v109 = vld [vmem:[#allocation4] sm:$0xff]
    %v110 = vld [vmem:[#allocation4 + $0x8] sm:$0xff]
    %v111 = vld [vmem:[#allocation4 + $0x10] sm:$0xff]
    %v112 = vld [vmem:[#allocation4 + $0x18] sm:$0xf]
    %v113 = vld [vmem:[#allocation4 + $0x20] sm:$0xff]
    %v114 = vld [vmem:[#allocation4 + $0x28] sm:$0xff]
    %v115 = vld [vmem:[#allocation4 + $0x30] sm:$0xff]
    %v116 = vld [vmem:[#allocation4 + $0x38] sm:$0xf]
    %v125 = vunpack.c.l.b16 %v109
    %v126 = vunpack.c.h.b16 %v109
    %v127 = vunpack.c.l.b16 %v110
    %v128 = vunpack.c.h.b16 %v110
    %v129 = vunpack.c.l.b16 %v111
    %v130 = vunpack.c.h.b16 %v111
    %v131 = vunpack.c.l.b16 %v112
    %v132 = vunpack.c.l.b16 %v113
    %v133 = vunpack.c.h.b16 %v113
    %v134 = vunpack.c.l.b16 %v114
    %v135 = vunpack.c.h.b16 %v114
    %v136 = vunpack.c.l.b16 %v115
    %v137 = vunpack.c.h.b16 %v115
    %v138 = vunpack.c.l.b16 %v116
    %v139 = vpack.c.b16 %v132, %v125
    %v140 = vpack.c.b16 %v133, %v126
    %v141 = vpack.c.b16 %v134, %v127
    %v142 = vpack.c.b16 %v135, %v128
    %v143 = vpack.c.b16 %v136, %v129
    %v144 = vpack.c.b16 %v137, %v130
    %v145 = vpack.c.b16 %v138, %v131
    %146 = vrot.lane.b32.xlu0 %v139, 18
    %v147 = vpop.permute.xlu0 %146
    %148 = vrot.lane.b32.xlu0 %v140, 18
    %v149 = vpop.permute.xlu0 %148
    %150 = vrot.lane.b32.xlu0 %v141, 18
    %v151 = vpop.permute.xlu0 %150
    %152 = vrot.lane.b32.xlu0 %v142, 18
    %v153 = vpop.permute.xlu0 %152
    %154 = vrot.lane.b32.xlu0 %v143, 18
    %v155 = vpop.permute.xlu0 %154
    %156 = vrot.lane.b32.xlu0 %v144, 18
    %v157 = vpop.permute.xlu0 %156
    %158 = vrot.lane.b32.xlu0 %v145, 18
    %v159 = vpop.permute.xlu0 %158
    %vm160 = vcmask 146432
    %v161 = vsel %vm160, %v147, %v149
    %v162 = vsel %vm160, %v149, %v151
    %v163 = vsel %vm160, %v151, %v153
    %v164 = vsel %vm160, %v153, %v155
    %v165 = vsel %vm160, %v155, %v157
    %v166 = vsel %vm160, %v157, %v159
    %173 = vst [vmem:[#allocation3 + $0x30] sm:$0xff] %v161
    %174 = vst [vmem:[#allocation3 + $0x38] sm:$0xff] %v162
    %175 = vst [vmem:[#allocation3 + $0x40] sm:$0xff] %v163
    %176 = vst [vmem:[#allocation3 + $0x48] sm:$0xff] %v164
    %177 = vst [vmem:[#allocation3 + $0x50] sm:$0xff] %v165
    %178 = vst [vmem:[#allocation3 + $0x58] sm:$0xff] %v166
    %v179 = vld [vmem:[#allocation4] sm:$0xff]
    %v180 = vld [vmem:[#allocation4 + $0x8] sm:$0xff]
    %v181 = vld [vmem:[#allocation4 + $0x10] sm:$0xff]
    %v182 = vld [vmem:[#allocation4 + $0x18] sm:$0xf]
    %v183 = vld [vmem:[#allocation4 + $0x20] sm:$0xff]
    %v184 = vld [vmem:[#allocation4 + $0x28] sm:$0xff]
    %v185 = vld [vmem:[#allocation4 + $0x30] sm:$0xff]
    %v186 = vld [vmem:[#allocation4 + $0x38] sm:$0xf]
    %v195 = vunpack.c.l.b16 %v179
    %v196 = vunpack.c.h.b16 %v179
    %v197 = vunpack.c.l.b16 %v180
    %v198 = vunpack.c.h.b16 %v180
    %v199 = vunpack.c.l.b16 %v181
    %v200 = vunpack.c.h.b16 %v181
    %v201 = vunpack.c.l.b16 %v182
    %v202 = vunpack.c.l.b16 %v183
    %v203 = vunpack.c.h.b16 %v183
    %v204 = vunpack.c.l.b16 %v184
    %v205 = vunpack.c.h.b16 %v184
    %v206 = vunpack.c.l.b16 %v185
    %v207 = vunpack.c.h.b16 %v185
    %v208 = vunpack.c.l.b16 %v186
    %v209 = vpack.c.b16 %v202, %v195
    %v210 = vpack.c.b16 %v203, %v196
    %v211 = vpack.c.b16 %v204, %v197
    %v212 = vpack.c.b16 %v205, %v198
    %v213 = vpack.c.b16 %v206, %v199
    %v214 = vpack.c.b16 %v207, %v200
    %v215 = vpack.c.b16 %v208, %v201
    %216 = vrot.lane.b32.xlu0 %v209, 17
    %v217 = vpop.permute.xlu0 %216
    %218 = vrot.lane.b32.xlu0 %v210, 17
    %v219 = vpop.permute.xlu0 %218
    %220 = vrot.lane.b32.xlu0 %v211, 17
    %v221 = vpop.permute.xlu0 %220
    %222 = vrot.lane.b32.xlu0 %v212, 17
    %v223 = vpop.permute.xlu0 %222
    %224 = vrot.lane.b32.xlu0 %v213, 17
    %v225 = vpop.permute.xlu0 %224
    %226 = vrot.lane.b32.xlu0 %v214, 17
    %v227 = vpop.permute.xlu0 %226
    %228 = vrot.lane.b32.xlu0 %v215, 17
    %v229 = vpop.permute.xlu0 %228
    %vm230 = vcmask 138240
    %v231 = vsel %vm230, %v217, %v219
    %v232 = vsel %vm230, %v219, %v221
    %v233 = vsel %vm230, %v221, %v223
    %v234 = vsel %vm230, %v223, %v225
    %v235 = vsel %vm230, %v225, %v227
    %v236 = vsel %vm230, %v227, %v229
    %243 = vst [vmem:[#allocation3 + $0x60] sm:$0xff] %v231
    %244 = vst [vmem:[#allocation3 + $0x68] sm:$0xff] %v232
    %245 = vst [vmem:[#allocation3 + $0x70] sm:$0xff] %v233
    %246 = vst [vmem:[#allocation3 + $0x78] sm:$0xff] %v234
    %247 = vst [vmem:[#allocation3 + $0x80] sm:$0xff] %v235
    %248 = vst [vmem:[#allocation3 + $0x88] sm:$0xff] %v236
    %v249 = vld [vmem:[#allocation4] sm:$0xff]
    %v250 = vld [vmem:[#allocation4 + $0x8] sm:$0xff]
    %v251 = vld [vmem:[#allocation4 + $0x10] sm:$0xff]
    %v252 = vld [vmem:[#allocation4 + $0x18] sm:$0xf]
    %v253 = vld [vmem:[#allocation4 + $0x20] sm:$0xff]
    %v254 = vld [vmem:[#allocation4 + $0x28] sm:$0xff]
    %v255 = vld [vmem:[#allocation4 + $0x30] sm:$0xff]
    %v256 = vld [vmem:[#allocation4 + $0x38] sm:$0xf]
    %v265 = vunpack.c.l.b16 %v249
    %v266 = vunpack.c.h.b16 %v249
    %v267 = vunpack.c.l.b16 %v250
    %v268 = vunpack.c.h.b16 %v250
    %v269 = vunpack.c.l.b16 %v251
    %v270 = vunpack.c.h.b16 %v251
    %v271 = vunpack.c.l.b16 %v252
    %v272 = vunpack.c.l.b16 %v253
    %v273 = vunpack.c.h.b16 %v253
    %v274 = vunpack.c.l.b16 %v254
    %v275 = vunpack.c.h.b16 %v254
    %v276 = vunpack.c.l.b16 %v255
    %v277 = vunpack.c.h.b16 %v255
    %v278 = vunpack.c.l.b16 %v256
    %v279 = vpack.c.b16 %v272, %v265
    %v280 = vpack.c.b16 %v273, %v266
    %v281 = vpack.c.b16 %v274, %v267
    %v282 = vpack.c.b16 %v275, %v268
    %v283 = vpack.c.b16 %v276, %v269
    %v284 = vpack.c.b16 %v277, %v270
    %v285 = vpack.c.b16 %v278, %v271
    %286 = vrot.lane.b32.xlu0 %v279, 1
    %v287 = vpop.permute.xlu0 %286
    %288 = vrot.lane.b32.xlu0 %v280, 1
    %v289 = vpop.permute.xlu0 %288
    %290 = vrot.lane.b32.xlu0 %v281, 1
    %v291 = vpop.permute.xlu0 %290
    %292 = vrot.lane.b32.xlu0 %v282, 1
    %v293 = vpop.permute.xlu0 %292
    %294 = vrot.lane.b32.xlu0 %v283, 1
    %v295 = vpop.permute.xlu0 %294
    %296 = vrot.lane.b32.xlu0 %v284, 1
    %v297 = vpop.permute.xlu0 %296
    %298 = vrot.lane.b32.xlu0 %v285, 1
    %v299 = vpop.permute.xlu0 %298
    %vm300 = vcmask 7168
    %v301 = vsel %vm300, %v287, %v289
    %v302 = vsel %vm300, %v289, %v291
    %v303 = vsel %vm300, %v291, %v293
    %v304 = vsel %vm300, %v293, %v295
    %v305 = vsel %vm300, %v295, %v297
    %v306 = vsel %vm300, %v297, %v299
    %313 = vst [vmem:[#allocation3 + $0x90] sm:$0xff] %v301
    %314 = vst [vmem:[#allocation3 + $0x98] sm:$0xff] %v302
    %315 = vst [vmem:[#allocation3 + $0xa0] sm:$0xff] %v303
    %316 = vst [vmem:[#allocation3 + $0xa8] sm:$0xff] %v304
    %317 = vst [vmem:[#allocation3 + $0xb0] sm:$0xff] %v305
    %318 = vst [vmem:[#allocation3 + $0xb8] sm:$0xff] %v306
    %v319 = vld [vmem:[#allocation4 + $0x4] sm:$0xff]
    %v320 = vld [vmem:[#allocation4 + $0xc] sm:$0xff]
    %v321 = vld [vmem:[#allocation4 + $0x14] sm:$0xff]
    %v322 = vld [vmem:[#allocation4 + $0x24] sm:$0xff]
    %v323 = vld [vmem:[#allocation4 + $0x2c] sm:$0xff]
    %v324 = vld [vmem:[#allocation4 + $0x34] sm:$0xff]
    %v331 = vunpack.c.l.b16 %v319
    %v332 = vunpack.c.h.b16 %v319
    %v333 = vunpack.c.l.b16 %v320
    %v334 = vunpack.c.h.b16 %v320
    %v335 = vunpack.c.l.b16 %v321
    %v336 = vunpack.c.h.b16 %v321
    %v337 = vunpack.c.l.b16 %v322
    %v338 = vunpack.c.h.b16 %v322
    %v339 = vunpack.c.l.b16 %v323
    %v340 = vunpack.c.h.b16 %v323
    %v341 = vunpack.c.l.b16 %v324
    %v342 = vunpack.c.h.b16 %v324
    %v343 = vpack.c.b16 %v337, %v331
    %v344 = vpack.c.b16 %v338, %v332
    %v345 = vpack.c.b16 %v339, %v333
    %v346 = vpack.c.b16 %v340, %v334
    %v347 = vpack.c.b16 %v341, %v335
    %v348 = vpack.c.b16 %v342, %v336
    %355 = vst [vmem:[#allocation3 + $0xc0] sm:$0xff] %v343
    %356 = vst [vmem:[#allocation3 + $0xc8] sm:$0xff] %v344
    %357 = vst [vmem:[#allocation3 + $0xd0] sm:$0xff] %v345
    %358 = vst [vmem:[#allocation3 + $0xd8] sm:$0xff] %v346
    %359 = vst [vmem:[#allocation3 + $0xe0] sm:$0xff] %v347
    %360 = vst [vmem:[#allocation3 + $0xe8] sm:$0xff] %v348
    %v361 = vld [vmem:[#allocation4 + $0x4] sm:$0xff]
    %v362 = vld [vmem:[#allocation4 + $0xc] sm:$0xff]
    %v363 = vld [vmem:[#allocation4 + $0x14] sm:$0xff]
    %v364 = vld [vmem:[#allocation4 + $0x1c] sm:$0xf]
    %v365 = vld [vmem:[#allocation4 + $0x24] sm:$0xff]
    %v366 = vld [vmem:[#allocation4 + $0x2c] sm:$0xff]
    %v367 = vld [vmem:[#allocation4 + $0x34] sm:$0xff]
    %v368 = vld [vmem:[#allocation4 + $0x3c] sm:$0xf]
    %v377 = vunpack.c.l.b16 %v361
    %v378 = vunpack.c.h.b16 %v361
    %v379 = vunpack.c.l.b16 %v362
    %v380 = vunpack.c.h.b16 %v362
    %v381 = vunpack.c.l.b16 %v363
    %v382 = vunpack.c.h.b16 %v363
    %v383 = vunpack.c.l.b16 %v364
    %v384 = vunpack.c.l.b16 %v365
    %v385 = vunpack.c.h.b16 %v365
    %v386 = vunpack.c.l.b16 %v366
    %v387 = vunpack.c.h.b16 %v366
    %v388 = vunpack.c.l.b16 %v367
    %v389 = vunpack.c.h.b16 %v367
    %v390 = vunpack.c.l.b16 %v368
    %v391 = vpack.c.b16 %v384, %v377
    %v392 = vpack.c.b16 %v385, %v378
    %v393 = vpack.c.b16 %v386, %v379
    %v394 = vpack.c.b16 %v387, %v380
    %v395 = vpack.c.b16 %v388, %v381
    %v396 = vpack.c.b16 %v389, %v382
    %v397 = vpack.c.b16 %v390, %v383
    %398 = vrot.lane.b32.xlu0 %v391, 127
    %v399 = vpop.permute.xlu0 %398
    %400 = vrot.lane.b32.xlu0 %v392, 127
    %v401 = vpop.permute.xlu0 %400
    %402 = vrot.lane.b32.xlu0 %v393, 127
    %v403 = vpop.permute.xlu0 %402
    %404 = vrot.lane.b32.xlu0 %v394, 127
    %v405 = vpop.permute.xlu0 %404
    %406 = vrot.lane.b32.xlu0 %v395, 127
    %v407 = vpop.permute.xlu0 %406
    %408 = vrot.lane.b32.xlu0 %v396, 127
    %v409 = vpop.permute.xlu0 %408
    %410 = vrot.lane.b32.xlu0 %v397, 127
    %v411 = vpop.permute.xlu0 %410
    %vm412 = vcmask 1039360
    %v413 = vsel %vm412, %v399, %v401
    %v414 = vsel %vm412, %v401, %v403
    %v415 = vsel %vm412, %v403, %v405
    %v416 = vsel %vm412, %v405, %v407
    %v417 = vsel %vm412, %v407, %v409
    %v418 = vsel %vm412, %v409, %v411
    %425 = vst [vmem:[#allocation3 + $0xf0] sm:$0xff] %v413
    %426 = vst [vmem:[#allocation3 + $0xf8] sm:$0xff] %v414
    %427 = vst [vmem:[#allocation3 + $0x100] sm:$0xff] %v415
    %428 = vst [vmem:[#allocation3 + $0x108] sm:$0xff] %v416
    %429 = vst [vmem:[#allocation3 + $0x110] sm:$0xff] %v417
    %430 = vst [vmem:[#allocation3 + $0x118] sm:$0xff] %v418
    %v431 = vld [vmem:[#allocation4 + $0x4] sm:$0xff]
    %v432 = vld [vmem:[#allocation4 + $0xc] sm:$0xff]
    %v433 = vld [vmem:[#allocation4 + $0x14] sm:$0xff]
    %v434 = vld [vmem:[#allocation4 + $0x1c] sm:$0xf]
    %v435 = vld [vmem:[#allocation4 + $0x24] sm:$0xff]
    %v436 = vld [vmem:[#allocation4 + $0x2c] sm:$0xff]
    %v437 = vld [vmem:[#allocation4 + $0x34] sm:$0xff]
    %v438 = vld [vmem:[#allocation4 + $0x3c] sm:$0xf]
    %v447 = vunpack.c.l.b16 %v431
    %v448 = vunpack.c.h.b16 %v431
    %v449 = vunpack.c.l.b16 %v432
    %v450 = vunpack.c.h.b16 %v432
    %v451 = vunpack.c.l.b16 %v433
    %v452 = vunpack.c.h.b16 %v433
    %v453 = vunpack.c.l.b16 %v434
    %v454 = vunpack.c.l.b16 %v435
    %v455 = vunpack.c.h.b16 %v435
    %v456 = vunpack.c.l.b16 %v436
    %v457 = vunpack.c.h.b16 %v436
    %v458 = vunpack.c.l.b16 %v437
    %v459 = vunpack.c.h.b16 %v437
    %v460 = vunpack.c.l.b16 %v438
    %v461 = vpack.c.b16 %v454, %v447
    %v462 = vpack.c.b16 %v455, %v448
    %v463 = vpack.c.b16 %v456, %v449
    %v464 = vpack.c.b16 %v457, %v450
    %v465 = vpack.c.b16 %v458, %v451
    %v466 = vpack.c.b16 %v459, %v452
    %v467 = vpack.c.b16 %v460, %v453
    %468 = vrot.lane.b32.xlu0 %v461, 111
    %v469 = vpop.permute.xlu0 %468
    %470 = vrot.lane.b32.xlu0 %v462, 111
    %v471 = vpop.permute.xlu0 %470
    %472 = vrot.lane.b32.xlu0 %v463, 111
    %v473 = vpop.permute.xlu0 %472
    %474 = vrot.lane.b32.xlu0 %v464, 111
    %v475 = vpop.permute.xlu0 %474
    %476 = vrot.lane.b32.xlu0 %v465, 111
    %v477 = vpop.permute.xlu0 %476
    %478 = vrot.lane.b32.xlu0 %v466, 111
    %v479 = vpop.permute.xlu0 %478
    %480 = vrot.lane.b32.xlu0 %v467, 111
    %v481 = vpop.permute.xlu0 %480
    %vm482 = vcmask 908288
    %v483 = vsel %vm482, %v469, %v471
    %v484 = vsel %vm482, %v471, %v473
    %v485 = vsel %vm482, %v473, %v475
    %v486 = vsel %vm482, %v475, %v477
    %v487 = vsel %vm482, %v477, %v479
    %v488 = vsel %vm482, %v479, %v481
    %495 = vst [vmem:[#allocation3 + $0x120] sm:$0xff] %v483
    %496 = vst [vmem:[#allocation3 + $0x128] sm:$0xff] %v484
    %497 = vst [vmem:[#allocation3 + $0x130] sm:$0xff] %v485
    %498 = vst [vmem:[#allocation3 + $0x138] sm:$0xff] %v486
    %499 = vst [vmem:[#allocation3 + $0x140] sm:$0xff] %v487
    %500 = vst [vmem:[#allocation3 + $0x148] sm:$0xff] %v488
    %v501 = vld [vmem:[#allocation4 + $0x4] sm:$0xff]
    %v502 = vld [vmem:[#allocation4 + $0xc] sm:$0xff]
    %v503 = vld [vmem:[#allocation4 + $0x14] sm:$0xff]
    %v504 = vld [vmem:[#allocation4 + $0x1c] sm:$0xf]
    %v505 = vld [vmem:[#allocation4 + $0x24] sm:$0xff]
    %v506 = vld [vmem:[#allocation4 + $0x2c] sm:$0xff]
    %v507 = vld [vmem:[#allocation4 + $0x34] sm:$0xff]
    %v508 = vld [vmem:[#allocation4 + $0x3c] sm:$0xf]
    %v517 = vunpack.c.l.b16 %v501
    %v518 = vunpack.c.h.b16 %v501
    %v519 = vunpack.c.l.b16 %v502
    %v520 = vunpack.c.h.b16 %v502
    %v521 = vunpack.c.l.b16 %v503
    %v522 = vunpack.c.h.b16 %v503
    %v523 = vunpack.c.l.b16 %v504
    %v524 = vunpack.c.l.b16 %v505
    %v525 = vunpack.c.h.b16 %v505
    %v526 = vunpack.c.l.b16 %v506
    %v527 = vunpack.c.h.b16 %v506
    %v528 = vunpack.c.l.b16 %v507
    %v529 = vunpack.c.h.b16 %v507
    %v530 = vunpack.c.l.b16 %v508
    %v531 = vpack.c.b16 %v524, %v517
    %v532 = vpack.c.b16 %v525, %v518
    %v533 = vpack.c.b16 %v526, %v519
    %v534 = vpack.c.b16 %v527, %v520
    %v535 = vpack.c.b16 %v528, %v521
    %v536 = vpack.c.b16 %v529, %v522
    %v537 = vpack.c.b16 %v530, %v523
    %538 = vrot.lane.b32.xlu0 %v531, 110
    %v539 = vpop.permute.xlu0 %538
    %540 = vrot.lane.b32.xlu0 %v532, 110
    %v541 = vpop.permute.xlu0 %540
    %542 = vrot.lane.b32.xlu0 %v533, 110
    %v543 = vpop.permute.xlu0 %542
    %544 = vrot.lane.b32.xlu0 %v534, 110
    %v545 = vpop.permute.xlu0 %544
    %546 = vrot.lane.b32.xlu0 %v535, 110
    %v547 = vpop.permute.xlu0 %546
    %548 = vrot.lane.b32.xlu0 %v536, 110
    %v549 = vpop.permute.xlu0 %548
    %550 = vrot.lane.b32.xlu0 %v537, 110
    %v551 = vpop.permute.xlu0 %550
    %vm552 = vcmask 900096
    %v553 = vsel %vm552, %v539, %v541
    %v554 = vsel %vm552, %v541, %v543
    %v555 = vsel %vm552, %v543, %v545
    %v556 = vsel %vm552, %v545, %v547
    %v557 = vsel %vm552, %v547, %v549
    %v558 = vsel %vm552, %v549, %v551
    %565 = vst [vmem:[#allocation3 + $0x150] sm:$0xff] %v553
    %566 = vst [vmem:[#allocation3 + $0x158] sm:$0xff] %v554
    %567 = vst [vmem:[#allocation3 + $0x160] sm:$0xff] %v555
    %568 = vst [vmem:[#allocation3 + $0x168] sm:$0xff] %v556
    %569 = vst [vmem:[#allocation3 + $0x170] sm:$0xff] %v557
    %570 = vst [vmem:[#allocation3 + $0x178] sm:$0xff] %v558
    %v571 = vld [vmem:[#allocation4 + $0x4] sm:$0xff]
    %v572 = vld [vmem:[#allocation4 + $0xc] sm:$0xff]
    %v573 = vld [vmem:[#allocation4 + $0x14] sm:$0xff]
    %v574 = vld [vmem:[#allocation4 + $0x1c] sm:$0xf]
    %v575 = vld [vmem:[#allocation4 + $0x24] sm:$0xff]
    %v576 = vld [vmem:[#allocation4 + $0x2c] sm:$0xff]
    %v577 = vld [vmem:[#allocation4 + $0x34] sm:$0xff]
    %v578 = vld [vmem:[#allocation4 + $0x3c] sm:$0xf]
    %v587 = vunpack.c.l.b16 %v571
    %v588 = vunpack.c.h.b16 %v571
    %v589 = vunpack.c.l.b16 %v572
    %v590 = vunpack.c.h.b16 %v572
    %v591 = vunpack.c.l.b16 %v573
    %v592 = vunpack.c.h.b16 %v573
    %v593 = vunpack.c.l.b16 %v574
    %v594 = vunpack.c.l.b16 %v575
    %v595 = vunpack.c.h.b16 %v575
    %v596 = vunpack.c.l.b16 %v576
    %v597 = vunpack.c.h.b16 %v576
    %v598 = vunpack.c.l.b16 %v577
    %v599 = vunpack.c.h.b16 %v577
    %v600 = vunpack.c.l.b16 %v578
    %v601 = vpack.c.b16 %v594, %v587
    %v602 = vpack.c.b16 %v595, %v588
    %v603 = vpack.c.b16 %v596, %v589
    %v604 = vpack.c.b16 %v597, %v590
    %v605 = vpack.c.b16 %v598, %v591
    %v606 = vpack.c.b16 %v599, %v592
    %v607 = vpack.c.b16 %v600, %v593
    %608 = vrot.lane.b32.xlu0 %v601, 109
    %v609 = vpop.permute.xlu0 %608
    %610 = vrot.lane.b32.xlu0 %v602, 109
    %v611 = vpop.permute.xlu0 %610
    %612 = vrot.lane.b32.xlu0 %v603, 109
    %v613 = vpop.permute.xlu0 %612
    %614 = vrot.lane.b32.xlu0 %v604, 109
    %v615 = vpop.permute.xlu0 %614
    %616 = vrot.lane.b32.xlu0 %v605, 109
    %v617 = vpop.permute.xlu0 %616
    %618 = vrot.lane.b32.xlu0 %v606, 109
    %v619 = vpop.permute.xlu0 %618
    %620 = vrot.lane.b32.xlu0 %v607, 109
    %v621 = vpop.permute.xlu0 %620
    %vm622 = vcmask 891904
    %v623 = vsel %vm622, %v609, %v611
    %v624 = vsel %vm622, %v611, %v613
    %v625 = vsel %vm622, %v613, %v615
    %v626 = vsel %vm622, %v615, %v617
    %v627 = vsel %vm622, %v617, %v619
    %v628 = vsel %vm622, %v619, %v621
    %635 = vst [vmem:[#allocation3 + $0x180] sm:$0xff] %v623
    %636 = vst [vmem:[#allocation3 + $0x188] sm:$0xff] %v624
    %637 = vst [vmem:[#allocation3 + $0x190] sm:$0xff] %v625
    %638 = vst [vmem:[#allocation3 + $0x198] sm:$0xff] %v626
    %639 = vst [vmem:[#allocation3 + $0x1a0] sm:$0xff] %v627
    %640 = vst [vmem:[#allocation3 + $0x1a8] sm:$0xff] %v628
    %v641 = vld [vmem:[%s1] sm:$0xff]
    %v642 = vld [vmem:[%s1 + $0x8] sm:$0xff]
    %v643 = vld [vmem:[#allocation3] sm:$0xff]
    %v644 = vld [vmem:[#allocation3 + $0x8] sm:$0xff]
    %v645 = vld [vmem:[#allocation3 + $0x10] sm:$0xff]
    %v646 = vld [vmem:[#allocation3 + $0x18] sm:$0xff]
    %v647 = vld [vmem:[#allocation3 + $0x20] sm:$0xff]
    %v648 = vld [vmem:[#allocation3 + $0x28] sm:$0xff]
    %v649 = vld [vmem:[#allocation3 + $0x30] sm:$0xff]
    %v650 = vld [vmem:[#allocation3 + $0x38] sm:$0xff]
    %v651 = vld [vmem:[#allocation3 + $0x40] sm:$0xff]
    %v652 = vld [vmem:[#allocation3 + $0x48] sm:$0xff]
    %v653 = vld [vmem:[#allocation3 + $0x50] sm:$0xff]
    %v654 = vld [vmem:[#allocation3 + $0x58] sm:$0xff]
    %v655 = vld [vmem:[#allocation3 + $0x60] sm:$0xff]
    %v656 = vld [vmem:[#allocation3 + $0x68] sm:$0xff]
    %v657 = vld [vmem:[#allocation3 + $0x70] sm:$0xff]
    %v658 = vld [vmem:[#allocation3 + $0x78] sm:$0xff]
    %v659 = vld [vmem:[#allocation3 + $0x80] sm:$0xff]
    %v660 = vld [vmem:[#allocation3 + $0x88] sm:$0xff]
    %v661 = vld [vmem:[#allocation3 + $0x90] sm:$0xff]
    %v662 = vld [vmem:[#allocation3 + $0x98] sm:$0xff]
    %v663 = vld [vmem:[#allocation3 + $0xa0] sm:$0xff]
    %v664 = vld [vmem:[#allocation3 + $0xa8] sm:$0xff]
    %v665 = vld [vmem:[#allocation3 + $0xb0] sm:$0xff]
    %v666 = vld [vmem:[#allocation3 + $0xb8] sm:$0xff]
    %v667 = vld [vmem:[#allocation3 + $0xc0] sm:$0xff]
    %v668 = vld [vmem:[#allocation3 + $0xc8] sm:$0xff]
    %v669 = vld [vmem:[#allocation3 + $0xd0] sm:$0xff]
    %v670 = vld [vmem:[#allocation3 + $0xd8] sm:$0xff]
    %v671 = vld [vmem:[#allocation3 + $0xe0] sm:$0xff]
    %v672 = vld [vmem:[#allocation3 + $0xe8] sm:$0xff]
    %v673 = vld [vmem:[#allocation3 + $0xf0] sm:$0xff]
    %v674 = vld [vmem:[#allocation3 + $0xf8] sm:$0xff]
    %v675 = vld [vmem:[#allocation3 + $0x100] sm:$0xff]
    %v676 = vld [vmem:[#allocation3 + $0x108] sm:$0xff]
    %v677 = vld [vmem:[#allocation3 + $0x110] sm:$0xff]
    %v678 = vld [vmem:[#allocation3 + $0x118] sm:$0xff]
    %v679 = vld [vmem:[#allocation3 + $0x120] sm:$0xff]
    %v680 = vld [vmem:[#allocation3 + $0x128] sm:$0xff]
    %v681 = vld [vmem:[#allocation3 + $0x130] sm:$0xff]
    %v682 = vld [vmem:[#allocation3 + $0x138] sm:$0xff]
    %v683 = vld [vmem:[#allocation3 + $0x140] sm:$0xff]
    %v684 = vld [vmem:[#allocation3 + $0x148] sm:$0xff]
    %v685 = vld [vmem:[#allocation3 + $0x150] sm:$0xff]
    %v686 = vld [vmem:[#allocation3 + $0x158] sm:$0xff]
    %v687 = vld [vmem:[#allocation3 + $0x160] sm:$0xff]
    %v688 = vld [vmem:[#allocation3 + $0x168] sm:$0xff]
    %v689 = vld [vmem:[#allocation3 + $0x170] sm:$0xff]
    %v690 = vld [vmem:[#allocation3 + $0x178] sm:$0xff]
    %v691 = vld [vmem:[#allocation3 + $0x180] sm:$0xff]
    %v692 = vld [vmem:[#allocation3 + $0x188] sm:$0xff]
    %v693 = vld [vmem:[#allocation3 + $0x190] sm:$0xff]
    %v694 = vld [vmem:[#allocation3 + $0x198] sm:$0xff]
    %v695 = vld [vmem:[#allocation3 + $0x1a0] sm:$0xff]
    %v696 = vld [vmem:[#allocation3 + $0x1a8] sm:$0xff]
    %v697 = vld [vmem:[%s2] sm:$0xff]
    %v698 = vld [vmem:[%s2 + $0x8] sm:$0xff]
    %700 = vset.pattern.permute.xlu0 0
    %701 = vperm.xlu0 %700, %v697
    %v702 = vpop.permute.xlu0 %701
    %705 = vset.pattern.permute.xlu0 0
    %706 = vperm.xlu0 %705, %v698
    %v707 = vpop.permute.xlu0 %706
    %v711 = vunpack.c.l.b16 %v641
    %v712 = vunpack.c.h.b16 %v641
    %v713 = vunpack.c.l.b16 %v642
    %v714 = vunpack.c.h.b16 %v642
    %v715 = vpack.c.b16 %v713, %v711
    %v716 = vpack.c.b16 %v714, %v712
    %vm718 = vcmask 130048
    %v720 = vsel %vm718, %v716, 0
    %722 = vmatprep.subr.bf16.mxu0 %v644
    %723 = vmatpush1.bf16.msra.mxu0 %v643
    %724 = vmatprep.subr.bf16.mxu0 %v650
    %725 = vmatpush1.bf16.msra.mxu0 %v649
    %726 = vmatprep.subr.bf16.mxu0 %v656
    %727 = vmatpush1.bf16.msra.mxu0 %v655
    %728 = vmatprep.subr.bf16.mxu0 %v662
    %729 = vmatpush1.bf16.msra.mxu0 %v661
    %730 = vmatprep.subr.bf16.mxu0 %v668
    %731 = vmatpush1.bf16.msra.mxu0 %v667
    %732 = vmatprep.subr.bf16.mxu0 %v674
    %733 = vmatpush1.bf16.msra.mxu0 %v673
    %734 = vmatprep.subr.bf16.mxu0 %v680
    %735 = vmatpush1.bf16.msra.mxu0 %v679
    %736 = vmatprep.subr.bf16.mxu0 %v686
    %737 = vmatpush1.bf16.msra.mxu0 %v685
    %738 = vmatprep.subr.bf16.mxu0 %v692
    %739 = vmatpush1.bf16.msra.mxu0 %v691
    %740 = vmatprep.subr.bf16.mxu0 0
    %741 = vmatpush1.bf16.msra.mxu0 0
    %742 = vmatprep.subr.bf16.mxu0 0
    %743 = vmatpush1.bf16.msra.mxu0 0
    %744 = vmatprep.subr.bf16.mxu0 0
    %745 = vmatpush1.bf16.msra.mxu0 0
    %746 = vmatprep.subr.bf16.mxu0 0
    %747 = vmatpush1.bf16.msra.mxu0 0
    %748 = vmatprep.subr.bf16.mxu0 0
    %749 = vmatpush1.bf16.msra.mxu0 0
    %750 = vmatprep.subr.bf16.mxu0 0
    %751 = vmatpush1.bf16.msra.mxu0 0
    %752 = vmatprep.subr.bf16.mxu0 0
    %753 = vmatpush1.bf16.msra.mxu0 0
    %754 = vmatprep.mubr.bf16.mxu0 %v720
    %755 = vmatmul.mubr.bf16.gmra.mrb[0].mxu0 %v715
    %v756 = vpop.f32.mrb[0].mxu0
    %v757 = vadd.f32 %v702, %v756
    %v758 = vpop.f32.mrb[0].mxu0
    %v759 = vadd.f32 %v702, %v758
    %v760 = vpop.f32.mrb[0].mxu0
    %v761 = vadd.f32 %v707, %v760
    %v762 = vpop.f32.mrb[0].mxu0
    %v763 = vadd.f32 %v707, %v762
    %764 = vdwg.mxu0
    %765 = vmatprep.subr.bf16.mxu0 %v646
    %766 = vmatpush1.bf16.msra.mxu0 %v645
    %767 = vmatprep.subr.bf16.mxu0 %v652
    %768 = vmatpush1.bf16.msra.mxu0 %v651
    %769 = vmatprep.subr.bf16.mxu0 %v658
    %770 = vmatpush1.bf16.msra.mxu0 %v657
    %771 = vmatprep.subr.bf16.mxu0 %v664
    %772 = vmatpush1.bf16.msra.mxu0 %v663
    %773 = vmatprep.subr.bf16.mxu0 %v670
    %774 = vmatpush1.bf16.msra.mxu0 %v669
    %775 = vmatprep.subr.bf16.mxu0 %v676
    %776 = vmatpush1.bf16.msra.mxu0 %v675
    %777 = vmatprep.subr.bf16.mxu0 %v682
    %778 = vmatpush1.bf16.msra.mxu0 %v681
    %779 = vmatprep.subr.bf16.mxu0 %v688
    %780 = vmatpush1.bf16.msra.mxu0 %v687
    %781 = vmatprep.subr.bf16.mxu0 %v694
    %782 = vmatpush1.bf16.msra.mxu0 %v693
    %783 = vmatprep.subr.bf16.mxu0 0
    %784 = vmatpush1.bf16.msra.mxu0 0
    %785 = vmatprep.subr.bf16.mxu0 0
    %786 = vmatpush1.bf16.msra.mxu0 0
    %787 = vmatprep.subr.bf16.mxu0 0
    %788 = vmatpush1.bf16.msra.mxu0 0
    %789 = vmatprep.subr.bf16.mxu0 0
    %790 = vmatpush1.bf16.msra.mxu0 0
    %791 = vmatprep.subr.bf16.mxu0 0
    %792 = vmatpush1.bf16.msra.mxu0 0
    %793 = vmatprep.subr.bf16.mxu0 0
    %794 = vmatpush1.bf16.msra.mxu0 0
    %795 = vmatprep.subr.bf16.mxu0 0
    %796 = vmatpush1.bf16.msra.mxu0 0
    %797 = vmatprep.mubr.bf16.mxu0 %v720
    %798 = vmatmul.mubr.bf16.gmra.mrb[0].mxu0 %v715
    %v799 = vpop.f32.mrb[0].mxu0
    %v800 = vadd.f32 %v702, %v799
    %v801 = vpop.f32.mrb[0].mxu0
    %v802 = vadd.f32 %v702, %v801
    %v803 = vpop.f32.mrb[0].mxu0
    %v804 = vadd.f32 %v707, %v803
    %v805 = vpop.f32.mrb[0].mxu0
    %v806 = vadd.f32 %v707, %v805
    %807 = vdwg.mxu0
    %808 = vmatprep.subr.bf16.mxu0 %v648
    %809 = vmatpush1.bf16.msra.mxu0 %v647
    %810 = vmatprep.subr.bf16.mxu0 %v654
    %811 = vmatpush1.bf16.msra.mxu0 %v653
    %812 = vmatprep.subr.bf16.mxu0 %v660
    %813 = vmatpush1.bf16.msra.mxu0 %v659
    %814 = vmatprep.subr.bf16.mxu0 %v666
    %815 = vmatpush1.bf16.msra.mxu0 %v665
    %816 = vmatprep.subr.bf16.mxu0 %v672
    %817 = vmatpush1.bf16.msra.mxu0 %v671
    %818 = vmatprep.subr.bf16.mxu0 %v678
    %819 = vmatpush1.bf16.msra.mxu0 %v677
    %820 = vmatprep.subr.bf16.mxu0 %v684
    %821 = vmatpush1.bf16.msra.mxu0 %v683
    %822 = vmatprep.subr.bf16.mxu0 %v690
    %823 = vmatpush1.bf16.msra.mxu0 %v689
    %824 = vmatprep.subr.bf16.mxu0 %v696
    %825 = vmatpush1.bf16.msra.mxu0 %v695
    %826 = vmatprep.subr.bf16.mxu0 0
    %827 = vmatpush1.bf16.msra.mxu0 0
    %828 = vmatprep.subr.bf16.mxu0 0
    %829 = vmatpush1.bf16.msra.mxu0 0
    %830 = vmatprep.subr.bf16.mxu0 0
    %831 = vmatpush1.bf16.msra.mxu0 0
    %832 = vmatprep.subr.bf16.mxu0 0
    %833 = vmatpush1.bf16.msra.mxu0 0
    %834 = vmatprep.subr.bf16.mxu0 0
    %835 = vmatpush1.bf16.msra.mxu0 0
    %836 = vmatprep.subr.bf16.mxu0 0
    %837 = vmatpush1.bf16.msra.mxu0 0
    %838 = vmatprep.subr.bf16.mxu0 0
    %839 = vmatpush1.bf16.msra.mxu0 0
    %840 = vmatprep.mubr.bf16.mxu0 %v720
    %841 = vmatmul.mubr.bf16.gmra.mrb[0].mxu0 %v715
    %v842 = vpop.f32.mrb[0].mxu0
    %v843 = vadd.f32 %v702, %v842
    %v844 = vpop.f32.mrb[0].mxu0
    %v845 = vadd.f32 %v702, %v844
    %v846 = vpop.f32.mrb[0].mxu0
    %v847 = vadd.f32 %v707, %v846
    %v848 = vpop.f32.mrb[0].mxu0
    %v849 = vadd.f32 %v707, %v848
    %850 = vdwg.mxu0
    %v851 = vmax.f32 %v757, 0.0
    %v852 = vmax.f32 %v759, 0.0
    %v853 = vmax.f32 %v800, 0.0
    %v854 = vmax.f32 %v802, 0.0
    %v855 = vmax.f32 %v843, 0.0
    %v856 = vmax.f32 %v845, 0.0
    %v857 = vmax.f32 %v761, 0.0
    %v858 = vmax.f32 %v763, 0.0
    %v859 = vmax.f32 %v804, 0.0
    %v860 = vmax.f32 %v806, 0.0
    %v861 = vmax.f32 %v847, 0.0
    %v862 = vmax.f32 %v849, 0.0
    %v863 = vld [vmem:[%s5] sm:$0x3f]
    %v865 = vlaneseq
    %v866 = vshrl.u32 %v865, 7
    %v867 = vsub.s32 0, %v866
    %v868 = vrot.slane %v863, %v867
    %v869 = vlaneseq
    %v870 = vshrl.u32 %v869, 7
    %v871 = vsub.s32 1, %v870
    %v872 = vrot.slane %v863, %v871
    %v873 = vlaneseq
    %v874 = vshrl.u32 %v873, 7
    %v875 = vsub.s32 2, %v874
    %v876 = vrot.slane %v863, %v875
    %v877 = vlaneseq
    %v878 = vshrl.u32 %v877, 7
    %v879 = vsub.s32 3, %v878
    %v880 = vrot.slane %v863, %v879
    %v881 = vlaneseq
    %v882 = vshrl.u32 %v881, 7
    %v883 = vsub.s32 4, %v882
    %v884 = vrot.slane %v863, %v883
    %v885 = vlaneseq
    %v886 = vshrl.u32 %v885, 7
    %v887 = vsub.s32 5, %v886
    %v888 = vrot.slane %v863, %v887
    %v895 = vmul.f32 %v851, %v868
    %v896 = vmul.f32 %v852, %v872
    %v897 = vmul.f32 %v853, %v876
    %v898 = vmul.f32 %v854, %v880
    %v899 = vmul.f32 %v855, %v884
    %v900 = vmul.f32 %v856, %v888
    %v901 = vmul.f32 %v857, %v868
    %v902 = vmul.f32 %v858, %v872
    %v903 = vmul.f32 %v859, %v876
    %v904 = vmul.f32 %v860, %v880
    %v905 = vmul.f32 %v861, %v884
    %v906 = vmul.f32 %v862, %v888
    %v907 = vpack.c.bf16 %v901, %v895
    %v908 = vpack.c.bf16 %v902, %v896
    %v909 = vpack.c.bf16 %v903, %v897
    %v910 = vpack.c.bf16 %v904, %v898
    %v911 = vpack.c.bf16 %v905, %v899
    %v912 = vpack.c.bf16 %v906, %v900
    %913 = vst [vmem:[#allocation2] sm:$0xff] 0
    %914 = vst [vmem:[#allocation2 + $0x38] sm:$0xff] 0
    %915 = vst [vmem:[#allocation2 + $0x8] sm:$0xff] %v907
    %916 = vst [vmem:[#allocation2 + $0x10] sm:$0xff] %v908
    %917 = vst [vmem:[#allocation2 + $0x18] sm:$0xff] %v909
    %918 = vst [vmem:[#allocation2 + $0x20] sm:$0xff] %v910
    %919 = vst [vmem:[#allocation2 + $0x28] sm:$0xff] %v911
    %920 = vst [vmem:[#allocation2 + $0x30] sm:$0xff] %v912
    %v921 = vld [vmem:[#allocation2] sm:$0xff]
    %v922 = vld [vmem:[#allocation2 + $0x8] sm:$0xff]
    %v923 = vld [vmem:[#allocation2 + $0x10] sm:$0xff]
    %v924 = vld [vmem:[#allocation2 + $0x18] sm:$0xff]
    %v925 = vld [vmem:[#allocation2 + $0x20] sm:$0xff]
    %v926 = vld [vmem:[#allocation2 + $0x28] sm:$0xff]
    %v927 = vld [vmem:[#allocation2 + $0x30] sm:$0xff]
    %935 = vrot.lane.b32.xlu0 %v921, 19
    %v936 = vpop.permute.xlu0 %935
    %937 = vrot.lane.b32.xlu0 %v922, 19
    %v938 = vpop.permute.xlu0 %937
    %939 = vrot.lane.b32.xlu0 %v923, 19
    %v940 = vpop.permute.xlu0 %939
    %941 = vrot.lane.b32.xlu0 %v924, 19
    %v942 = vpop.permute.xlu0 %941
    %943 = vrot.lane.b32.xlu0 %v925, 19
    %v944 = vpop.permute.xlu0 %943
    %945 = vrot.lane.b32.xlu0 %v926, 19
    %v946 = vpop.permute.xlu0 %945
    %947 = vrot.lane.b32.xlu0 %v927, 19
    %v948 = vpop.permute.xlu0 %947
    %v949 = vsel %vm90, %v936, %v938
    %v950 = vsel %vm90, %v938, %v940
    %v951 = vsel %vm90, %v940, %v942
    %v952 = vsel %vm90, %v942, %v944
    %v953 = vsel %vm90, %v944, %v946
    %v954 = vsel %vm90, %v946, %v948
    %961 = vst [vmem:[#allocation3] sm:$0xff] %v949
    %962 = vst [vmem:[#allocation3 + $0x8] sm:$0xff] %v950
    %963 = vst [vmem:[#allocation3 + $0x10] sm:$0xff] %v951
    %964 = vst [vmem:[#allocation3 + $0x18] sm:$0xff] %v952
    %965 = vst [vmem:[#allocation3 + $0x20] sm:$0xff] %v953
    %966 = vst [vmem:[#allocation3 + $0x28] sm:$0xff] %v954
    %v967 = vld [vmem:[#allocation2] sm:$0xff]
    %v968 = vld [vmem:[#allocation2 + $0x8] sm:$0xff]
    %v969 = vld [vmem:[#allocation2 + $0x10] sm:$0xff]
    %v970 = vld [vmem:[#allocation2 + $0x18] sm:$0xff]
    %v971 = vld [vmem:[#allocation2 + $0x20] sm:$0xff]
    %v972 = vld [vmem:[#allocation2 + $0x28] sm:$0xff]
    %v973 = vld [vmem:[#allocation2 + $0x30] sm:$0xff]
    %981 = vrot.lane.b32.xlu0 %v967, 18
    %v982 = vpop.permute.xlu0 %981
    %983 = vrot.lane.b32.xlu0 %v968, 18
    %v984 = vpop.permute.xlu0 %983
    %985 = vrot.lane.b32.xlu0 %v969, 18
    %v986 = vpop.permute.xlu0 %985
    %987 = vrot.lane.b32.xlu0 %v970, 18
    %v988 = vpop.permute.xlu0 %987
    %989 = vrot.lane.b32.xlu0 %v971, 18
    %v990 = vpop.permute.xlu0 %989
    %991 = vrot.lane.b32.xlu0 %v972, 18
    %v992 = vpop.permute.xlu0 %991
    %993 = vrot.lane.b32.xlu0 %v973, 18
    %v994 = vpop.permute.xlu0 %993
    %v995 = vsel %vm160, %v982, %v984
    %v996 = vsel %vm160, %v984, %v986
    %v997 = vsel %vm160, %v986, %v988
    %v998 = vsel %vm160, %v988, %v990
    %v999 = vsel %vm160, %v990, %v992
    %v1000 = vsel %vm160, %v992, %v994
    %1007 = vst [vmem:[#allocation3 + $0x30] sm:$0xff] %v995
    %1008 = vst [vmem:[#allocation3 + $0x38] sm:$0xff] %v996
    %1009 = vst [vmem:[#allocation3 + $0x40] sm:$0xff] %v997
    %1010 = vst [vmem:[#allocation3 + $0x48] sm:$0xff] %v998
    %1011 = vst [vmem:[#allocation3 + $0x50] sm:$0xff] %v999
    %1012 = vst [vmem:[#allocation3 + $0x58] sm:$0xff] %v1000
    %v1013 = vld [vmem:[#allocation2] sm:$0xff]
    %v1014 = vld [vmem:[#allocation2 + $0x8] sm:$0xff]
    %v1015 = vld [vmem:[#allocation2 + $0x10] sm:$0xff]
    %v1016 = vld [vmem:[#allocation2 + $0x18] sm:$0xff]
    %v1017 = vld [vmem:[#allocation2 + $0x20] sm:$0xff]
    %v1018 = vld [vmem:[#allocation2 + $0x28] sm:$0xff]
    %v1019 = vld [vmem:[#allocation2 + $0x30] sm:$0xff]
    %1027 = vrot.lane.b32.xlu0 %v1013, 17
    %v1028 = vpop.permute.xlu0 %1027
    %1029 = vrot.lane.b32.xlu0 %v1014, 17
    %v1030 = vpop.permute.xlu0 %1029
    %1031 = vrot.lane.b32.xlu0 %v1015, 17
    %v1032 = vpop.permute.xlu0 %1031
    %1033 = vrot.lane.b32.xlu0 %v1016, 17
    %v1034 = vpop.permute.xlu0 %1033
    %1035 = vrot.lane.b32.xlu0 %v1017, 17
    %v1036 = vpop.permute.xlu0 %1035
    %1037 = vrot.lane.b32.xlu0 %v1018, 17
    %v1038 = vpop.permute.xlu0 %1037
    %1039 = vrot.lane.b32.xlu0 %v1019, 17
    %v1040 = vpop.permute.xlu0 %1039
    %v1041 = vsel %vm230, %v1028, %v1030
    %v1042 = vsel %vm230, %v1030, %v1032
    %v1043 = vsel %vm230, %v1032, %v1034
    %v1044 = vsel %vm230, %v1034, %v1036
    %v1045 = vsel %vm230, %v1036, %v1038
    %v1046 = vsel %vm230, %v1038, %v1040
    %1053 = vst [vmem:[#allocation3 + $0x60] sm:$0xff] %v1041
    %1054 = vst [vmem:[#allocation3 + $0x68] sm:$0xff] %v1042
    %1055 = vst [vmem:[#allocation3 + $0x70] sm:$0xff] %v1043
    %1056 = vst [vmem:[#allocation3 + $0x78] sm:$0xff] %v1044
    %1057 = vst [vmem:[#allocation3 + $0x80] sm:$0xff] %v1045
    %1058 = vst [vmem:[#allocation3 + $0x88] sm:$0xff] %v1046
    %v1059 = vld [vmem:[#allocation2] sm:$0xff]
    %v1060 = vld [vmem:[#allocation2 + $0x8] sm:$0xff]
    %v1061 = vld [vmem:[#allocation2 + $0x10] sm:$0xff]
    %v1062 = vld [vmem:[#allocation2 + $0x18] sm:$0xff]
    %v1063 = vld [vmem:[#allocation2 + $0x20] sm:$0xff]
    %v1064 = vld [vmem:[#allocation2 + $0x28] sm:$0xff]
    %v1065 = vld [vmem:[#allocation2 + $0x30] sm:$0xff]
    %1073 = vrot.lane.b32.xlu0 %v1059, 1
    %v1074 = vpop.permute.xlu0 %1073
    %1075 = vrot.lane.b32.xlu0 %v1060, 1
    %v1076 = vpop.permute.xlu0 %1075
    %1077 = vrot.lane.b32.xlu0 %v1061, 1
    %v1078 = vpop.permute.xlu0 %1077
    %1079 = vrot.lane.b32.xlu0 %v1062, 1
    %v1080 = vpop.permute.xlu0 %1079
    %1081 = vrot.lane.b32.xlu0 %v1063, 1
    %v1082 = vpop.permute.xlu0 %1081
    %1083 = vrot.lane.b32.xlu0 %v1064, 1
    %v1084 = vpop.permute.xlu0 %1083
    %1085 = vrot.lane.b32.xlu0 %v1065, 1
    %v1086 = vpop.permute.xlu0 %1085
    %v1087 = vsel %vm300, %v1074, %v1076
    %v1088 = vsel %vm300, %v1076, %v1078
    %v1089 = vsel %vm300, %v1078, %v1080
    %v1090 = vsel %vm300, %v1080, %v1082
    %v1091 = vsel %vm300, %v1082, %v1084
    %v1092 = vsel %vm300, %v1084, %v1086
    %1099 = vst [vmem:[#allocation3 + $0x90] sm:$0xff] %v1087
    %1100 = vst [vmem:[#allocation3 + $0x98] sm:$0xff] %v1088
    %1101 = vst [vmem:[#allocation3 + $0xa0] sm:$0xff] %v1089
    %1102 = vst [vmem:[#allocation3 + $0xa8] sm:$0xff] %v1090
    %1103 = vst [vmem:[#allocation3 + $0xb0] sm:$0xff] %v1091
    %1104 = vst [vmem:[#allocation3 + $0xb8] sm:$0xff] %v1092
    %v1105 = vld [vmem:[#allocation2 + $0x8] sm:$0xff]
    %v1106 = vld [vmem:[#allocation2 + $0x10] sm:$0xff]
    %v1107 = vld [vmem:[#allocation2 + $0x18] sm:$0xff]
    %v1108 = vld [vmem:[#allocation2 + $0x20] sm:$0xff]
    %v1109 = vld [vmem:[#allocation2 + $0x28] sm:$0xff]
    %v1110 = vld [vmem:[#allocation2 + $0x30] sm:$0xff]
    %1111 = vst [vmem:[#allocation3 + $0xc0] sm:$0xff] %v1105
    %1112 = vst [vmem:[#allocation3 + $0xc8] sm:$0xff] %v1106
    %1113 = vst [vmem:[#allocation3 + $0xd0] sm:$0xff] %v1107
    %1114 = vst [vmem:[#allocation3 + $0xd8] sm:$0xff] %v1108
    %1115 = vst [vmem:[#allocation3 + $0xe0] sm:$0xff] %v1109
    %1116 = vst [vmem:[#allocation3 + $0xe8] sm:$0xff] %v1110
    %v1117 = vld [vmem:[#allocation2 + $0x8] sm:$0xff]
    %v1118 = vld [vmem:[#allocation2 + $0x10] sm:$0xff]
    %v1119 = vld [vmem:[#allocation2 + $0x18] sm:$0xff]
    %v1120 = vld [vmem:[#allocation2 + $0x20] sm:$0xff]
    %v1121 = vld [vmem:[#allocation2 + $0x28] sm:$0xff]
    %v1122 = vld [vmem:[#allocation2 + $0x30] sm:$0xff]
    %v1123 = vld [vmem:[#allocation2 + $0x38] sm:$0xff]
    %1131 = vrot.lane.b32.xlu0 %v1117, 127
    %v1132 = vpop.permute.xlu0 %1131
    %1133 = vrot.lane.b32.xlu0 %v1118, 127
    %v1134 = vpop.permute.xlu0 %1133
    %1135 = vrot.lane.b32.xlu0 %v1119, 127
    %v1136 = vpop.permute.xlu0 %1135
    %1137 = vrot.lane.b32.xlu0 %v1120, 127
    %v1138 = vpop.permute.xlu0 %1137
    %1139 = vrot.lane.b32.xlu0 %v1121, 127
    %v1140 = vpop.permute.xlu0 %1139
    %1141 = vrot.lane.b32.xlu0 %v1122, 127
    %v1142 = vpop.permute.xlu0 %1141
    %1143 = vrot.lane.b32.xlu0 %v1123, 127
    %v1144 = vpop.permute.xlu0 %1143
    %v1145 = vsel %vm412, %v1132, %v1134
    %v1146 = vsel %vm412, %v1134, %v1136
    %v1147 = vsel %vm412, %v1136, %v1138
    %v1148 = vsel %vm412, %v1138, %v1140
    %v1149 = vsel %vm412, %v1140, %v1142
    %v1150 = vsel %vm412, %v1142, %v1144
    %1157 = vst [vmem:[#allocation3 + $0xf0] sm:$0xff] %v1145
    %1158 = vst [vmem:[#allocation3 + $0xf8] sm:$0xff] %v1146
    %1159 = vst [vmem:[#allocation3 + $0x100] sm:$0xff] %v1147
    %1160 = vst [vmem:[#allocation3 + $0x108] sm:$0xff] %v1148
    %1161 = vst [vmem:[#allocation3 + $0x110] sm:$0xff] %v1149
    %1162 = vst [vmem:[#allocation3 + $0x118] sm:$0xff] %v1150
    %v1163 = vld [vmem:[#allocation2 + $0x8] sm:$0xff]
    %v1164 = vld [vmem:[#allocation2 + $0x10] sm:$0xff]
    %v1165 = vld [vmem:[#allocation2 + $0x18] sm:$0xff]
    %v1166 = vld [vmem:[#allocation2 + $0x20] sm:$0xff]
    %v1167 = vld [vmem:[#allocation2 + $0x28] sm:$0xff]
    %v1168 = vld [vmem:[#allocation2 + $0x30] sm:$0xff]
    %v1169 = vld [vmem:[#allocation2 + $0x38] sm:$0xff]
    %1177 = vrot.lane.b32.xlu0 %v1163, 111
    %v1178 = vpop.permute.xlu0 %1177
    %1179 = vrot.lane.b32.xlu0 %v1164, 111
    %v1180 = vpop.permute.xlu0 %1179
    %1181 = vrot.lane.b32.xlu0 %v1165, 111
    %v1182 = vpop.permute.xlu0 %1181
    %1183 = vrot.lane.b32.xlu0 %v1166, 111
    %v1184 = vpop.permute.xlu0 %1183
    %1185 = vrot.lane.b32.xlu0 %v1167, 111
    %v1186 = vpop.permute.xlu0 %1185
    %1187 = vrot.lane.b32.xlu0 %v1168, 111
    %v1188 = vpop.permute.xlu0 %1187
    %1189 = vrot.lane.b32.xlu0 %v1169, 111
    %v1190 = vpop.permute.xlu0 %1189
    %v1191 = vsel %vm482, %v1178, %v1180
    %v1192 = vsel %vm482, %v1180, %v1182
    %v1193 = vsel %vm482, %v1182, %v1184
    %v1194 = vsel %vm482, %v1184, %v1186
    %v1195 = vsel %vm482, %v1186, %v1188
    %v1196 = vsel %vm482, %v1188, %v1190
    %1203 = vst [vmem:[#allocation3 + $0x120] sm:$0xff] %v1191
    %1204 = vst [vmem:[#allocation3 + $0x128] sm:$0xff] %v1192
    %1205 = vst [vmem:[#allocation3 + $0x130] sm:$0xff] %v1193
    %1206 = vst [vmem:[#allocation3 + $0x138] sm:$0xff] %v1194
    %1207 = vst [vmem:[#allocation3 + $0x140] sm:$0xff] %v1195
    %1208 = vst [vmem:[#allocation3 + $0x148] sm:$0xff] %v1196
    %v1209 = vld [vmem:[#allocation2 + $0x8] sm:$0xff]
    %v1210 = vld [vmem:[#allocation2 + $0x10] sm:$0xff]
    %v1211 = vld [vmem:[#allocation2 + $0x18] sm:$0xff]
    %v1212 = vld [vmem:[#allocation2 + $0x20] sm:$0xff]
    %v1213 = vld [vmem:[#allocation2 + $0x28] sm:$0xff]
    %v1214 = vld [vmem:[#allocation2 + $0x30] sm:$0xff]
    %v1215 = vld [vmem:[#allocation2 + $0x38] sm:$0xff]
    %1223 = vrot.lane.b32.xlu0 %v1209, 110
    %v1224 = vpop.permute.xlu0 %1223
    %1225 = vrot.lane.b32.xlu0 %v1210, 110
    %v1226 = vpop.permute.xlu0 %1225
    %1227 = vrot.lane.b32.xlu0 %v1211, 110
    %v1228 = vpop.permute.xlu0 %1227
    %1229 = vrot.lane.b32.xlu0 %v1212, 110
    %v1230 = vpop.permute.xlu0 %1229
    %1231 = vrot.lane.b32.xlu0 %v1213, 110
    %v1232 = vpop.permute.xlu0 %1231
    %1233 = vrot.lane.b32.xlu0 %v1214, 110
    %v1234 = vpop.permute.xlu0 %1233
    %1235 = vrot.lane.b32.xlu0 %v1215, 110
    %v1236 = vpop.permute.xlu0 %1235
    %v1237 = vsel %vm552, %v1224, %v1226
    %v1238 = vsel %vm552, %v1226, %v1228
    %v1239 = vsel %vm552, %v1228, %v1230
    %v1240 = vsel %vm552, %v1230, %v1232
    %v1241 = vsel %vm552, %v1232, %v1234
    %v1242 = vsel %vm552, %v1234, %v1236
    %1249 = vst [vmem:[#allocation3 + $0x150] sm:$0xff] %v1237
    %1250 = vst [vmem:[#allocation3 + $0x158] sm:$0xff] %v1238
    %1251 = vst [vmem:[#allocation3 + $0x160] sm:$0xff] %v1239
    %1252 = vst [vmem:[#allocation3 + $0x168] sm:$0xff] %v1240
    %1253 = vst [vmem:[#allocation3 + $0x170] sm:$0xff] %v1241
    %1254 = vst [vmem:[#allocation3 + $0x178] sm:$0xff] %v1242
    %v1255 = vld [vmem:[#allocation2 + $0x8] sm:$0xff]
    %v1256 = vld [vmem:[#allocation2 + $0x10] sm:$0xff]
    %v1257 = vld [vmem:[#allocation2 + $0x18] sm:$0xff]
    %v1258 = vld [vmem:[#allocation2 + $0x20] sm:$0xff]
    %v1259 = vld [vmem:[#allocation2 + $0x28] sm:$0xff]
    %v1260 = vld [vmem:[#allocation2 + $0x30] sm:$0xff]
    %v1261 = vld [vmem:[#allocation2 + $0x38] sm:$0xff]
    %1269 = vrot.lane.b32.xlu0 %v1255, 109
    %v1270 = vpop.permute.xlu0 %1269
    %1271 = vrot.lane.b32.xlu0 %v1256, 109
    %v1272 = vpop.permute.xlu0 %1271
    %1273 = vrot.lane.b32.xlu0 %v1257, 109
    %v1274 = vpop.permute.xlu0 %1273
    %1275 = vrot.lane.b32.xlu0 %v1258, 109
    %v1276 = vpop.permute.xlu0 %1275
    %1277 = vrot.lane.b32.xlu0 %v1259, 109
    %v1278 = vpop.permute.xlu0 %1277
    %1279 = vrot.lane.b32.xlu0 %v1260, 109
    %v1280 = vpop.permute.xlu0 %1279
    %1281 = vrot.lane.b32.xlu0 %v1261, 109
    %v1282 = vpop.permute.xlu0 %1281
    %v1283 = vsel %vm622, %v1270, %v1272
    %v1284 = vsel %vm622, %v1272, %v1274
    %v1285 = vsel %vm622, %v1274, %v1276
    %v1286 = vsel %vm622, %v1276, %v1278
    %v1287 = vsel %vm622, %v1278, %v1280
    %v1288 = vsel %vm622, %v1280, %v1282
    %1295 = vst [vmem:[#allocation3 + $0x180] sm:$0xff] %v1283
    %1296 = vst [vmem:[#allocation3 + $0x188] sm:$0xff] %v1284
    %1297 = vst [vmem:[#allocation3 + $0x190] sm:$0xff] %v1285
    %1298 = vst [vmem:[#allocation3 + $0x198] sm:$0xff] %v1286
    %1299 = vst [vmem:[#allocation3 + $0x1a0] sm:$0xff] %v1287
    %1300 = vst [vmem:[#allocation3 + $0x1a8] sm:$0xff] %v1288
    %v1301 = vld [vmem:[%s3] sm:$0xff]
    %v1302 = vld [vmem:[%s3 + $0x8] sm:$0xff]
    %v1303 = vld [vmem:[#allocation3] sm:$0xff]
    %v1304 = vld [vmem:[#allocation3 + $0x8] sm:$0xff]
    %v1305 = vld [vmem:[#allocation3 + $0x10] sm:$0xff]
    %v1306 = vld [vmem:[#allocation3 + $0x18] sm:$0xff]
    %v1307 = vld [vmem:[#allocation3 + $0x20] sm:$0xff]
    %v1308 = vld [vmem:[#allocation3 + $0x28] sm:$0xff]
    %v1309 = vld [vmem:[#allocation3 + $0x30] sm:$0xff]
    %v1310 = vld [vmem:[#allocation3 + $0x38] sm:$0xff]
    %v1311 = vld [vmem:[#allocation3 + $0x40] sm:$0xff]
    %v1312 = vld [vmem:[#allocation3 + $0x48] sm:$0xff]
    %v1313 = vld [vmem:[#allocation3 + $0x50] sm:$0xff]
    %v1314 = vld [vmem:[#allocation3 + $0x58] sm:$0xff]
    %v1315 = vld [vmem:[#allocation3 + $0x60] sm:$0xff]
    %v1316 = vld [vmem:[#allocation3 + $0x68] sm:$0xff]
    %v1317 = vld [vmem:[#allocation3 + $0x70] sm:$0xff]
    %v1318 = vld [vmem:[#allocation3 + $0x78] sm:$0xff]
    %v1319 = vld [vmem:[#allocation3 + $0x80] sm:$0xff]
    %v1320 = vld [vmem:[#allocation3 + $0x88] sm:$0xff]
    %v1321 = vld [vmem:[#allocation3 + $0x90] sm:$0xff]
    %v1322 = vld [vmem:[#allocation3 + $0x98] sm:$0xff]
    %v1323 = vld [vmem:[#allocation3 + $0xa0] sm:$0xff]
    %v1324 = vld [vmem:[#allocation3 + $0xa8] sm:$0xff]
    %v1325 = vld [vmem:[#allocation3 + $0xb0] sm:$0xff]
    %v1326 = vld [vmem:[#allocation3 + $0xb8] sm:$0xff]
    %v1327 = vld [vmem:[#allocation3 + $0xc0] sm:$0xff]
    %v1328 = vld [vmem:[#allocation3 + $0xc8] sm:$0xff]
    %v1329 = vld [vmem:[#allocation3 + $0xd0] sm:$0xff]
    %v1330 = vld [vmem:[#allocation3 + $0xd8] sm:$0xff]
    %v1331 = vld [vmem:[#allocation3 + $0xe0] sm:$0xff]
    %v1332 = vld [vmem:[#allocation3 + $0xe8] sm:$0xff]
    %v1333 = vld [vmem:[#allocation3 + $0xf0] sm:$0xff]
    %v1334 = vld [vmem:[#allocation3 + $0xf8] sm:$0xff]
    %v1335 = vld [vmem:[#allocation3 + $0x100] sm:$0xff]
    %v1336 = vld [vmem:[#allocation3 + $0x108] sm:$0xff]
    %v1337 = vld [vmem:[#allocation3 + $0x110] sm:$0xff]
    %v1338 = vld [vmem:[#allocation3 + $0x118] sm:$0xff]
    %v1339 = vld [vmem:[#allocation3 + $0x120] sm:$0xff]
    %v1340 = vld [vmem:[#allocation3 + $0x128] sm:$0xff]
    %v1341 = vld [vmem:[#allocation3 + $0x130] sm:$0xff]
    %v1342 = vld [vmem:[#allocation3 + $0x138] sm:$0xff]
    %v1343 = vld [vmem:[#allocation3 + $0x140] sm:$0xff]
    %v1344 = vld [vmem:[#allocation3 + $0x148] sm:$0xff]
    %v1345 = vld [vmem:[#allocation3 + $0x150] sm:$0xff]
    %v1346 = vld [vmem:[#allocation3 + $0x158] sm:$0xff]
    %v1347 = vld [vmem:[#allocation3 + $0x160] sm:$0xff]
    %v1348 = vld [vmem:[#allocation3 + $0x168] sm:$0xff]
    %v1349 = vld [vmem:[#allocation3 + $0x170] sm:$0xff]
    %v1350 = vld [vmem:[#allocation3 + $0x178] sm:$0xff]
    %v1351 = vld [vmem:[#allocation3 + $0x180] sm:$0xff]
    %v1352 = vld [vmem:[#allocation3 + $0x188] sm:$0xff]
    %v1353 = vld [vmem:[#allocation3 + $0x190] sm:$0xff]
    %v1354 = vld [vmem:[#allocation3 + $0x198] sm:$0xff]
    %v1355 = vld [vmem:[#allocation3 + $0x1a0] sm:$0xff]
    %v1356 = vld [vmem:[#allocation3 + $0x1a8] sm:$0xff]
    %v1357 = vld [vmem:[#allocation4 + $0x4] sm:$0xff]
    %v1358 = vld [vmem:[#allocation4 + $0xc] sm:$0xff]
    %v1359 = vld [vmem:[#allocation4 + $0x14] sm:$0xff]
    %v1360 = vld [vmem:[#allocation4 + $0x24] sm:$0xff]
    %v1361 = vld [vmem:[#allocation4 + $0x2c] sm:$0xff]
    %v1362 = vld [vmem:[#allocation4 + $0x34] sm:$0xff]
    %v1363 = vunpack.c.l.bf16 %v1357
    %v1364 = vunpack.c.h.bf16 %v1357
    %v1365 = vunpack.c.l.bf16 %v1358
    %v1366 = vunpack.c.h.bf16 %v1358
    %v1367 = vunpack.c.l.bf16 %v1359
    %v1368 = vunpack.c.h.bf16 %v1359
    %v1369 = vunpack.c.l.bf16 %v1360
    %v1370 = vunpack.c.h.bf16 %v1360
    %v1371 = vunpack.c.l.bf16 %v1361
    %v1372 = vunpack.c.h.bf16 %v1361
    %v1373 = vunpack.c.l.bf16 %v1362
    %v1374 = vunpack.c.h.bf16 %v1362
    %v1375 = vld [vmem:[%s4] sm:$0xff]
    %v1376 = vld [vmem:[%s4 + $0x8] sm:$0xff]
    %1378 = vset.pattern.permute.xlu0 0
    %1379 = vperm.xlu0 %1378, %v1375
    %v1380 = vpop.permute.xlu0 %1379
    %1383 = vset.pattern.permute.xlu0 0
    %1384 = vperm.xlu0 %1383, %v1376
    %v1385 = vpop.permute.xlu0 %1384
    %v1389 = vunpack.c.l.b16 %v1301
    %v1390 = vunpack.c.h.b16 %v1301
    %v1391 = vunpack.c.l.b16 %v1302
    %v1392 = vunpack.c.h.b16 %v1302
    %v1393 = vpack.c.b16 %v1391, %v1389
    %v1394 = vpack.c.b16 %v1392, %v1390
    %v1397 = vsel %vm718, %v1394, 0
    %1399 = vmatprep.subr.bf16.mxu0 %v1304
    %1400 = vmatpush1.bf16.msra.mxu0 %v1303
    %1401 = vmatprep.subr.bf16.mxu0 %v1310
    %1402 = vmatpush1.bf16.msra.mxu0 %v1309
    %1403 = vmatprep.subr.bf16.mxu0 %v1316
    %1404 = vmatpush1.bf16.msra.mxu0 %v1315
    %1405 = vmatprep.subr.bf16.mxu0 %v1322
    %1406 = vmatpush1.bf16.msra.mxu0 %v1321
    %1407 = vmatprep.subr.bf16.mxu0 %v1328
    %1408 = vmatpush1.bf16.msra.mxu0 %v1327
    %1409 = vmatprep.subr.bf16.mxu0 %v1334
    %1410 = vmatpush1.bf16.msra.mxu0 %v1333
    %1411 = vmatprep.subr.bf16.mxu0 %v1340
    %1412 = vmatpush1.bf16.msra.mxu0 %v1339
    %1413 = vmatprep.subr.bf16.mxu0 %v1346
    %1414 = vmatpush1.bf16.msra.mxu0 %v1345
    %1415 = vmatprep.subr.bf16.mxu0 %v1352
    %1416 = vmatpush1.bf16.msra.mxu0 %v1351
    %1417 = vmatprep.subr.bf16.mxu0 0
    %1418 = vmatpush1.bf16.msra.mxu0 0
    %1419 = vmatprep.subr.bf16.mxu0 0
    %1420 = vmatpush1.bf16.msra.mxu0 0
    %1421 = vmatprep.subr.bf16.mxu0 0
    %1422 = vmatpush1.bf16.msra.mxu0 0
    %1423 = vmatprep.subr.bf16.mxu0 0
    %1424 = vmatpush1.bf16.msra.mxu0 0
    %1425 = vmatprep.subr.bf16.mxu0 0
    %1426 = vmatpush1.bf16.msra.mxu0 0
    %1427 = vmatprep.subr.bf16.mxu0 0
    %1428 = vmatpush1.bf16.msra.mxu0 0
    %1429 = vmatprep.subr.bf16.mxu0 0
    %1430 = vmatpush1.bf16.msra.mxu0 0
    %1431 = vmatprep.mubr.bf16.mxu0 %v1397
    %1432 = vmatmul.mubr.bf16.gmra.mrb[0].mxu0 %v1393
    %v1433 = vpop.f32.mrb[0].mxu0
    %v1434 = vadd.f32 %v1380, %v1433
    %v1435 = vpop.f32.mrb[0].mxu0
    %v1436 = vadd.f32 %v1380, %v1435
    %v1437 = vpop.f32.mrb[0].mxu0
    %v1438 = vadd.f32 %v1385, %v1437
    %v1439 = vpop.f32.mrb[0].mxu0
    %v1440 = vadd.f32 %v1385, %v1439
    %1441 = vdwg.mxu0
    %1442 = vmatprep.subr.bf16.mxu0 %v1306
    %1443 = vmatpush1.bf16.msra.mxu0 %v1305
    %1444 = vmatprep.subr.bf16.mxu0 %v1312
    %1445 = vmatpush1.bf16.msra.mxu0 %v1311
    %1446 = vmatprep.subr.bf16.mxu0 %v1318
    %1447 = vmatpush1.bf16.msra.mxu0 %v1317
    %1448 = vmatprep.subr.bf16.mxu0 %v1324
    %1449 = vmatpush1.bf16.msra.mxu0 %v1323
    %1450 = vmatprep.subr.bf16.mxu0 %v1330
    %1451 = vmatpush1.bf16.msra.mxu0 %v1329
    %1452 = vmatprep.subr.bf16.mxu0 %v1336
    %1453 = vmatpush1.bf16.msra.mxu0 %v1335
    %1454 = vmatprep.subr.bf16.mxu0 %v1342
    %1455 = vmatpush1.bf16.msra.mxu0 %v1341
    %1456 = vmatprep.subr.bf16.mxu0 %v1348
    %1457 = vmatpush1.bf16.msra.mxu0 %v1347
    %1458 = vmatprep.subr.bf16.mxu0 %v1354
    %1459 = vmatpush1.bf16.msra.mxu0 %v1353
    %1460 = vmatprep.subr.bf16.mxu0 0
    %1461 = vmatpush1.bf16.msra.mxu0 0
    %1462 = vmatprep.subr.bf16.mxu0 0
    %1463 = vmatpush1.bf16.msra.mxu0 0
    %1464 = vmatprep.subr.bf16.mxu0 0
    %1465 = vmatpush1.bf16.msra.mxu0 0
    %1466 = vmatprep.subr.bf16.mxu0 0
    %1467 = vmatpush1.bf16.msra.mxu0 0
    %1468 = vmatprep.subr.bf16.mxu0 0
    %1469 = vmatpush1.bf16.msra.mxu0 0
    %1470 = vmatprep.subr.bf16.mxu0 0
    %1471 = vmatpush1.bf16.msra.mxu0 0
    %1472 = vmatprep.subr.bf16.mxu0 0
    %1473 = vmatpush1.bf16.msra.mxu0 0
    %1474 = vmatprep.mubr.bf16.mxu0 %v1397
    %1475 = vmatmul.mubr.bf16.gmra.mrb[0].mxu0 %v1393
    %v1476 = vpop.f32.mrb[0].mxu0
    %v1477 = vadd.f32 %v1380, %v1476
    %v1478 = vpop.f32.mrb[0].mxu0
    %v1479 = vadd.f32 %v1380, %v1478
    %v1480 = vpop.f32.mrb[0].mxu0
    %v1481 = vadd.f32 %v1385, %v1480
    %v1482 = vpop.f32.mrb[0].mxu0
    %v1483 = vadd.f32 %v1385, %v1482
    %1484 = vdwg.mxu0
    %1485 = vmatprep.subr.bf16.mxu0 %v1308
    %1486 = vmatpush1.bf16.msra.mxu0 %v1307
    %1487 = vmatprep.subr.bf16.mxu0 %v1314
    %1488 = vmatpush1.bf16.msra.mxu0 %v1313
    %1489 = vmatprep.subr.bf16.mxu0 %v1320
    %1490 = vmatpush1.bf16.msra.mxu0 %v1319
    %1491 = vmatprep.subr.bf16.mxu0 %v1326
    %1492 = vmatpush1.bf16.msra.mxu0 %v1325
    %1493 = vmatprep.subr.bf16.mxu0 %v1332
    %1494 = vmatpush1.bf16.msra.mxu0 %v1331
    %1495 = vmatprep.subr.bf16.mxu0 %v1338
    %1496 = vmatpush1.bf16.msra.mxu0 %v1337
    %1497 = vmatprep.subr.bf16.mxu0 %v1344
    %1498 = vmatpush1.bf16.msra.mxu0 %v1343
    %1499 = vmatprep.subr.bf16.mxu0 %v1350
    %1500 = vmatpush1.bf16.msra.mxu0 %v1349
    %1501 = vmatprep.subr.bf16.mxu0 %v1356
    %1502 = vmatpush1.bf16.msra.mxu0 %v1355
    %1503 = vmatprep.subr.bf16.mxu0 0
    %1504 = vmatpush1.bf16.msra.mxu0 0
    %1505 = vmatprep.subr.bf16.mxu0 0
    %1506 = vmatpush1.bf16.msra.mxu0 0
    %1507 = vmatprep.subr.bf16.mxu0 0
    %1508 = vmatpush1.bf16.msra.mxu0 0
    %1509 = vmatprep.subr.bf16.mxu0 0
    %1510 = vmatpush1.bf16.msra.mxu0 0
    %1511 = vmatprep.subr.bf16.mxu0 0
    %1512 = vmatpush1.bf16.msra.mxu0 0
    %1513 = vmatprep.subr.bf16.mxu0 0
    %1514 = vmatpush1.bf16.msra.mxu0 0
    %1515 = vmatprep.subr.bf16.mxu0 0
    %1516 = vmatpush1.bf16.msra.mxu0 0
    %1517 = vmatprep.mubr.bf16.mxu0 %v1397
    %1518 = vmatmul.mubr.bf16.gmra.mrb[0].mxu0 %v1393
    %v1519 = vpop.f32.mrb[0].mxu0
    %v1520 = vadd.f32 %v1380, %v1519
    %v1521 = vpop.f32.mrb[0].mxu0
    %v1522 = vadd.f32 %v1380, %v1521
    %v1523 = vpop.f32.mrb[0].mxu0
    %v1524 = vadd.f32 %v1385, %v1523
    %v1525 = vpop.f32.mrb[0].mxu0
    %v1526 = vadd.f32 %v1385, %v1525
    %1527 = vdwg.mxu0
    %v1528 = vadd.f32 %v1434, %v1363
    %v1529 = vadd.f32 %v1436, %v1364
    %v1530 = vadd.f32 %v1477, %v1365
    %v1531 = vadd.f32 %v1479, %v1366
    %v1532 = vadd.f32 %v1520, %v1367
    %v1533 = vadd.f32 %v1522, %v1368
    %v1534 = vadd.f32 %v1438, %v1369
    %v1535 = vadd.f32 %v1440, %v1370
    %v1536 = vadd.f32 %v1481, %v1371
    %v1537 = vadd.f32 %v1483, %v1372
    %v1538 = vadd.f32 %v1524, %v1373
    %v1539 = vadd.f32 %v1526, %v1374
    %v1540 = vmax.f32 %v1528, 0.0
    %v1541 = vmax.f32 %v1529, 0.0
    %v1542 = vmax.f32 %v1530, 0.0
    %v1543 = vmax.f32 %v1531, 0.0
    %v1544 = vmax.f32 %v1532, 0.0
    %v1545 = vmax.f32 %v1533, 0.0
    %v1546 = vmax.f32 %v1534, 0.0
    %v1547 = vmax.f32 %v1535, 0.0
    %v1548 = vmax.f32 %v1536, 0.0
    %v1549 = vmax.f32 %v1537, 0.0
    %v1550 = vmax.f32 %v1538, 0.0
    %v1551 = vmax.f32 %v1539, 0.0
    %1552 = vst [vmem:[#allocation7] sm:$0xff] %v1540
    %1553 = vst [vmem:[#allocation7 + $0x8] sm:$0xff] %v1541
    %1554 = vst [vmem:[#allocation7 + $0x10] sm:$0xff] %v1542
    %1555 = vst [vmem:[#allocation7 + $0x18] sm:$0xff] %v1543
    %1556 = vst [vmem:[#allocation7 + $0x20] sm:$0xff] %v1544
    %1557 = vst [vmem:[#allocation7 + $0x28] sm:$0xff] %v1545
    %1558 = vst [vmem:[#allocation7 + $0x30] sm:$0xff] %v1546
    %1559 = vst [vmem:[#allocation7 + $0x38] sm:$0xff] %v1547
    %1560 = vst [vmem:[#allocation7 + $0x40] sm:$0xff] %v1548
    %1561 = vst [vmem:[#allocation7 + $0x48] sm:$0xff] %v1549
    %1562 = vst [vmem:[#allocation7 + $0x50] sm:$0xff] %v1550
    %1563 = vst [vmem:[#allocation7 + $0x58] sm:$0xff] %v1551
    // Predicated region
    $region30: #{tpu_custom_call.1} parent=1 // pred_check
      _
    $region31: #{tpu_custom_call.1} parent=1 // pred_check_branch
      %1565 = sbr.rel (0) target = $region33
    $region32: #{tpu_custom_call.1} parent=1 // pred_region
      %s1567 = ssub.s32 1536, 1536
      %1568 = vsyncadd [#allocation6], %s1567
      %s1569 = sshll.u32 [#allocation7], 4
      %s1570 = int_to_ptr.vmem [resolvable:$true] %s1569
      %1575 = dma.vmem_to_hbm [thread:$0]  %s1570, 1536, %s6, [#allocation6], 768, 768, 48
    $region33: #{tpu_custom_call.1} parent=1 // pred_fallthru
      _
    // Predicated region
    $region34: #{tpu_custom_call.1} parent=1 // pred_check
      _
    $region35: #{tpu_custom_call.1} parent=1 // pred_check_branch
      %1577 = sbr.rel (0) target = $region37
    $region36: #{tpu_custom_call.1} parent=1 // pred_region
      %1578 = dma.done [#allocation6], 1536
    $region37: #{tpu_custom_call.1} parent=1 // pred_fallthru
      _
    %1579 = vsyncpa [#allocation5], 1
    %1580 = vsyncpa [#allocation6], 1

</llo_original>
